<compile_context>
chip_gen: v5e
topology: v5e:2x2
jax: 0.10.0
libtpu: 0.0.40
codegen_flags: <defaults>
</compile_context>

<pallas_src>
import jax
import jax.numpy as jnp
from jax.experimental import pallas as pl
from jax.experimental.pallas import tpu as pltpu


_BIG = 1e30  # finite "infinity" sentinel (avoids any inf - inf = NaN hazard)


def _round_up(x, m):
    return ((x + m - 1) // m) * m


def make_triplet_angular_margin_loss(margin=0.5,
                                     normalize_feature=True,
                                     add_absolute=True,
                                     absolute_loss_weight=1.0,
                                     ap_value=0.8,
                                     an_value=0.4,
                                     label_smoothing=0.0,
                                     block_rows=128,
                                     block_classes=1024,
                                     matmul_dtype=jnp.bfloat16,
                                     resident_buffer_count=None,
                                     vmem_limit_bytes=None):
    """Builds loss_fn(features, logits, labels) -> scalar (forward pass only)."""
    margin = float(margin)
    ap_value = float(ap_value)
    an_value = float(an_value)
    absolute_loss_weight = float(absolute_loss_weight)
    label_smoothing = float(label_smoothing)
    matmul_dtype = jnp.dtype(matmul_dtype)

    def loss_fn(features, logits, labels):
        features = jnp.asarray(features, jnp.float32)
        logits = jnp.asarray(logits, jnp.float32)
        labels = jnp.asarray(labels, jnp.int32)

        b, d = features.shape
        _, c = logits.shape

        # ---- tile sizes: sublane-aligned row tile, 128-lane-aligned dims ----
        min_sub = max(8, 32 // matmul_dtype.itemsize)   # 8 f32, 16 bf16, 32 i8/fp8
        tm = _round_up(max(int(block_rows), min_sub), min_sub)
        if tm < 128:
            while 128 % tm:                 # make tm a divisor of 128
                tm += min_sub
        else:
            tm = _round_up(tm, 128)
        b_pad = _round_up(b, max(tm, 128))  # lane-dense similarity columns
        num_row_tiles = b_pad // tm

        d_pad = _round_up(d, 128)           # lane-dense MXU contraction dim

        tc = _round_up(min(int(block_classes), max(c, 1)), 128)
        c_pad = _round_up(c, tc)
        num_c_tiles = c_pad // tc

        # ---- hoisted L2-normalization + padding + MXU-operand cast ----
        if normalize_feature:
            features = features * jax.lax.rsqrt(
                jnp.sum(features * features, axis=-1, keepdims=True)
                + jnp.float32(1e-12))
        feats = jnp.pad(features, ((0, b_pad - b), (0, d_pad - d)))
        feats = feats.astype(matmul_dtype)            # cast RHS/LHS exactly once

        logits_p = jnp.pad(logits, ((0, 0), (0, c_pad - c)),
                           constant_values=-_BIG)     # padded classes: -1e30
        logits_p = jnp.pad(logits_p, ((0, b_pad - b), (0, 0)))

        labels_p = jnp.pad(labels, (0, b_pad - b), constant_values=-1)
        lab_col = labels_p.reshape(b_pad, 1)          # (B_pad, 1) per-row labels
        lab_row = labels_p.reshape(1, b_pad)          # (1, B_pad) per-col labels
        # additive bias removing padded columns from the negative max
        neg_bias = jnp.where(labels_p < 0, -_BIG, 0.0).astype(jnp.float32)
        neg_bias = neg_bias.reshape(1, b_pad)

        def kernel(feat_ref, logits_ref, lab_col_ref, lab_row_ref, neg_bias_ref,
                   out_ref, m_sc, l_sc, pick_sc, sum_sc):
            i = pl.program_id(0)
            cj = pl.program_id(1)
            last_c = pl.num_programs(1) - 1

            lab_c = lab_col_ref[...]                  # (tm, 1) i32

            # ---------- streamed cross entropy: online logsumexp over C ----------
            @pl.when(cj == 0)
            def _():
                m_sc[...] = jnp.full_like(m_sc, -_BIG)
                l_sc[...] = jnp.zeros_like(l_sc)
                pick_sc[...] = jnp.zeros_like(pick_sc)
                sum_sc[...] = jnp.zeros_like(sum_sc)

            logits_t = logits_ref[...]                # (tm, tc) f32
            m_prev = m_sc[...]
            m_new = jnp.maximum(m_prev, jnp.max(logits_t, axis=-1, keepdims=True))
            l_sc[...] = (l_sc[...] * jnp.exp(m_prev - m_new)
                         + jnp.sum(jnp.exp(logits_t - m_new),
                                   axis=-1, keepdims=True))
            m_sc[...] = m_new
            cls = jax.lax.broadcasted_iota(jnp.int32, logits_t.shape, 1) + cj * tc
            pick_sc[...] = pick_sc[...] + jnp.sum(
                jnp.where(cls == lab_c, logits_t, 0.0), axis=-1, keepdims=True)
            if label_smoothing > 0.0:
                sum_sc[...] = sum_sc[...] + jnp.sum(
                    jnp.where(cls < c, logits_t, 0.0), axis=-1, keepdims=True)

            # ---------- triplet part: once per row tile, after CE finishes -------
            @pl.when(cj == last_c)
            def _():
                row0 = pl.multiple_of(i * tm, tm)
                feats_t = feat_ref[pl.ds(row0, tm), :]   # (tm, d_pad), already
                                                         # normalized + cast
                lab_r = lab_row_ref[...]                 # (1, B_pad) i32
                neg_b = neg_bias_ref[...]                # (1, B_pad) f32

                # (tm, B_pad) cosine-similarity slice, f32 MXU accumulation,
                # contraction on dim 1 of both operands (no explicit transpose).
                dist = jax.lax.dot_general(
                    feats_t, feat_ref[...],
                    dimension_numbers=(((1,), (1,)), ((), ())),
                    preferred_element_type=jnp.float32)

                # hard positive / negative mining. Padded columns have label -1,
                # never equal to a valid row label -> no extra mask on the
                # positive branch; negatives use the additive -1e30 column bias.
                is_pos = lab_c == lab_r
                dist_ap = jnp.min(jnp.where(is_pos, dist, _BIG),
                                  axis=1, keepdims=True)
                dist_an = jnp.max(jnp.where(is_pos, -_BIG, dist + neg_b),
                                  axis=1, keepdims=True)

                # MarginRankingLoss(margin), y = 1
                per_row = jnp.maximum(dist_an - dist_ap + margin, 0.0)

                if add_absolute:
                    abs_ap = jnp.maximum(ap_value - dist_ap, 0.0)
                    d_an = dist_an - an_value
                    abs_an = jnp.where(d_an > 0.0, d_an, jnp.ones_like(d_an))
                    per_row = per_row + absolute_loss_weight * (abs_ap + abs_an)

                # finished streamed CE for this row tile
                if label_smoothing > 0.0:
                    target = ((1.0 - label_smoothing) * pick_sc[...]
                              + label_smoothing * (sum_sc[...] / c))
                else:
                    target = pick_sc[...]
                ce_row = m_sc[...] + jnp.log(l_sc[...]) - target
                per_row = per_row + ce_row

                per_row = jnp.where(lab_c >= 0, per_row, 0.0)  # drop padded rows
                out_ref[0, 0] = jnp.sum(per_row)

            # TODO(synk): for B large enough that the resident (B_pad, d_pad)
            # matrix no longer fits VMEM (v7x: 64 MiB), add a column-tile grid
            # axis over B and do flash-style online min/max mining with (tm, 1)
            # scratch accumulators instead of keeping the full RHS resident.

        # Resident operands (block index never changes). Optionally single-
        # buffer them (v7x VMEM budget) via pipeline_mode=pl.Buffered(1).
        if resident_buffer_count is not None:
            resident_kw = dict(pipeline_mode=pl.Buffered(int(resident_buffer_count)))
        else:
            resident_kw = {}
        feat_spec = pl.BlockSpec((b_pad, d_pad), lambda i, j: (0, 0), **resident_kw)
        lab_row_spec = pl.BlockSpec((1, b_pad), lambda i, j: (0, 0), **resident_kw)
        neg_bias_spec = pl.BlockSpec((1, b_pad), lambda i, j: (0, 0), **resident_kw)

        cost = pl.CostEstimate(
            flops=int(2 * b_pad * b_pad * d_pad
                      + 12 * b_pad * b_pad + 6 * b_pad * c_pad),
            transcendentals=int(b_pad * c_pad + 2 * b_pad),
            bytes_accessed=int(b_pad * d_pad * matmul_dtype.itemsize
                               + b_pad * c_pad * 4 + b_pad * 12
                               + num_row_tiles * 4),
        )

        partials = pl.pallas_call(
            kernel,
            grid=(num_row_tiles, num_c_tiles),
            in_specs=[
                feat_spec,                                    # resident features
                pl.BlockSpec((tm, tc), lambda i, j: (i, j)),  # logits C-tiles
                pl.BlockSpec((tm, 1), lambda i, j: (i, 0)),   # labels (col view)
                lab_row_spec,                                 # labels (row view)
                neg_bias_spec,                                # negative col bias
            ],
            out_specs=pl.BlockSpec((1, 1), lambda i, j: (i, 0),
                                   memory_space=pltpu.MemorySpace.SMEM),
            out_shape=jax.ShapeDtypeStruct((num_row_tiles, 1), jnp.float32),
            scratch_shapes=[pltpu.VMEM((tm, 1), jnp.float32)] * 4,
            compiler_params=pltpu.CompilerParams(
                dimension_semantics=("parallel", "arbitrary"),
                vmem_limit_bytes=vmem_limit_bytes),
            cost_estimate=cost,
        )(feats, logits_p, lab_col, lab_row, neg_bias)

        return jnp.sum(partials) / jnp.float32(b)

    return loss_fn


def _reference(features, logits, labels, margin=0.5, ap_value=0.8,
               an_value=0.4, absolute_loss_weight=1.0, label_smoothing=0.0):
    # pure-JAX reference mirroring the PyTorch module
    labels = labels.astype(jnp.int32)
    logp = jax.nn.log_softmax(logits, axis=-1)
    nll = -jnp.take_along_axis(logp, labels[:, None], axis=1)[:, 0]
    if label_smoothing > 0.0:
        smooth = -jnp.mean(logp, axis=-1)
        loss_ce = jnp.mean((1.0 - label_smoothing) * nll + label_smoothing * smooth)
    else:
        loss_ce = jnp.mean(nll)
    f = features / jnp.linalg.norm(features, axis=-1, keepdims=True)
    dist = f @ f.T
    is_pos = labels[:, None] == labels[None, :]
    dist_ap = jnp.min(jnp.where(is_pos, dist, jnp.inf), axis=1)
    dist_an = jnp.max(jnp.where(is_pos, -jnp.inf, dist), axis=1)
    loss = jnp.mean(jnp.maximum(dist_an - dist_ap + margin, 0.0))
    abs_ap = jnp.maximum(ap_value - dist_ap, 0.0)
    d_an = dist_an - an_value
    abs_an = jnp.where(d_an > 0.0, d_an, jnp.ones_like(d_an))
    loss = (jnp.mean(abs_an) + jnp.mean(abs_ap)) * absolute_loss_weight + loss
    return loss + loss_ce


if __name__ == "__main__":
    key = jax.random.PRNGKey(0)
    B, D, C = 8, 32, 4          # batch, feat_dim, class_num
    kf, kl = jax.random.split(key)
    features = jax.random.normal(kf, (B, D), dtype=jnp.float32)
    logits = jax.random.normal(kl, (B, C), dtype=jnp.float32)
    labels = jnp.array([0, 1, 2, 3, 0, 1, 2, 3], dtype=jnp.int32)

    # 1) f32 MXU operands: tight check against the pure-JAX reference
    loss_fn_f32 = make_triplet_angular_margin_loss(matmul_dtype=jnp.float32)
    loss = jax.block_until_ready(loss_fn_f32(features, logits, labels))
    ref = _reference(features, logits, labels)
    assert jnp.allclose(loss, ref, rtol=1e-4, atol=1e-4), (loss, ref)

    # 2) multi row-tile + multi C-tile (streamed CE) + label smoothing, f32
    B2, D2, C2 = 20, 40, 150
    k1, k2 = jax.random.split(jax.random.PRNGKey(1))
    features2 = jax.random.normal(k1, (B2, D2), dtype=jnp.float32)
    logits2 = jax.random.normal(k2, (B2, C2), dtype=jnp.float32)
    labels2 = jnp.arange(B2, dtype=jnp.int32) % C2
    loss_fn_tiled = make_triplet_angular_margin_loss(
        block_rows=64, block_classes=128, label_smoothing=0.1,
        matmul_dtype=jnp.float32)
    loss2 = jax.block_until_ready(loss_fn_tiled(features2, logits2, labels2))
    ref2 = _reference(features2, logits2, labels2, label_smoothing=0.1)
    assert jnp.allclose(loss2, ref2, rtol=1e-4, atol=1e-4), (loss2, ref2)

    # 3) default bf16 MXU operands (f32 accumulation): loose check.
    #    Mining near ties can pick a different pair than f32 -> expected
    #    (small) nondeterminism vs the f32 reference.
    loss_fn_bf16 = make_triplet_angular_margin_loss()
    loss3 = jax.block_until_ready(loss_fn_bf16(features, logits, labels))
    assert bool(jnp.isfinite(loss3)), loss3
    assert float(jnp.abs(loss3 - ref)) < 0.1, (loss3, ref)

    print("KERNEL_OK")
</pallas_src>

<mosaic_0001>
module attributes {stable_mosaic.version = 11 : i64} {
  func.func @kernel(%arg0: i32, %arg1: i32, %arg2: memref<128x128xf32, #tpu.memory_space<vmem>>, %arg3: memref<128x128xf32, #tpu.memory_space<vmem>>, %arg4: memref<128x1xi32, #tpu.memory_space<vmem>>, %arg5: memref<1x128xi32, #tpu.memory_space<vmem>>, %arg6: memref<1x128xf32, #tpu.memory_space<vmem>>, %arg7: memref<1x1xf32, #tpu.memory_space<smem>>, %arg8: memref<128x1xf32, #tpu.memory_space<vmem>>, %arg9: memref<128x1xf32, #tpu.memory_space<vmem>>, %arg10: memref<128x1xf32, #tpu.memory_space<vmem>>, %arg11: memref<128x1xf32, #tpu.memory_space<vmem>>) attributes {dimension_semantics = [#tpu.dimension_semantics<parallel>, #tpu.dimension_semantics<arbitrary>], iteration_bounds = array<i64: 1, 1>, scalar_prefetch = 0 : i64, scratch_operands = 4 : i64, tpu.core_type = #tpu.core_type<tc>, window_params = [{pipeline_mode = #tpu.pipeline_mode<synchronous>, transform_indices = @transform_0, window_bounds = array<i64: 128, 128>}, {transform_indices = @transform_1, window_bounds = array<i64: 128, 128>}, {transform_indices = @transform_2, window_bounds = array<i64: 128, 1>}, {pipeline_mode = #tpu.pipeline_mode<synchronous>, transform_indices = @transform_3, window_bounds = array<i64: 1, 128>}, {pipeline_mode = #tpu.pipeline_mode<synchronous>, transform_indices = @transform_4, window_bounds = array<i64: 1, 128>}, {transform_indices = @transform_5, window_bounds = array<i64: 1, 1>}]} {
    %c0 = arith.constant 0 : index
    %c0_0 = arith.constant 0 : index
    %0 = vector.load %arg4[%c0, %c0_0] : memref<128x1xi32, #tpu.memory_space<vmem>>, vector<128x1xi32>
    %c0_i32 = arith.constant 0 : i32
    %1 = arith.cmpi eq, %arg1, %c0_i32 : i32
    %2 = arith.extui %1 : i1 to i32
    %c0_i32_1 = arith.constant 0 : i32
    %3 = arith.cmpi ne, %2, %c0_i32_1 : i32
    scf.if %3 {
      %cst_21 = arith.constant -1.000000e+30 : f32
      %37 = vector.broadcast %cst_21 : f32 to vector<128x1xf32>
      %c0_22 = arith.constant 0 : index
      %c0_23 = arith.constant 0 : index
      %38 = vector.load %arg8[%c0_22, %c0_23] : memref<128x1xf32, #tpu.memory_space<vmem>>, vector<128x1xf32>
      tpu.vector_store %arg8[%c0_22, %c0_23], %37 {strides = array<i32>} : memref<128x1xf32, #tpu.memory_space<vmem>>, vector<128x1xf32>,
      %cst_24 = arith.constant 0.000000e+00 : f32
      %39 = vector.broadcast %cst_24 : f32 to vector<128x1xf32>
      %c0_25 = arith.constant 0 : index
      %c0_26 = arith.constant 0 : index
      %40 = vector.load %arg9[%c0_25, %c0_26] : memref<128x1xf32, #tpu.memory_space<vmem>>, vector<128x1xf32>
      tpu.vector_store %arg9[%c0_25, %c0_26], %39 {strides = array<i32>} : memref<128x1xf32, #tpu.memory_space<vmem>>, vector<128x1xf32>,
      %cst_27 = arith.constant 0.000000e+00 : f32
      %41 = vector.broadcast %cst_27 : f32 to vector<128x1xf32>
      %c0_28 = arith.constant 0 : index
      %c0_29 = arith.constant 0 : index
      %42 = vector.load %arg10[%c0_28, %c0_29] : memref<128x1xf32, #tpu.memory_space<vmem>>, vector<128x1xf32>
      tpu.vector_store %arg10[%c0_28, %c0_29], %41 {strides = array<i32>} : memref<128x1xf32, #tpu.memory_space<vmem>>, vector<128x1xf32>,
      %cst_30 = arith.constant 0.000000e+00 : f32
      %43 = vector.broadcast %cst_30 : f32 to vector<128x1xf32>
      %c0_31 = arith.constant 0 : index
      %c0_32 = arith.constant 0 : index
      %44 = vector.load %arg11[%c0_31, %c0_32] : memref<128x1xf32, #tpu.memory_space<vmem>>, vector<128x1xf32>
      tpu.vector_store %arg11[%c0_31, %c0_32], %43 {strides = array<i32>} : memref<128x1xf32, #tpu.memory_space<vmem>>, vector<128x1xf32>,
    } else {
    }
    %c0_2 = arith.constant 0 : index
    %c0_3 = arith.constant 0 : index
    %4 = vector.load %arg3[%c0_2, %c0_3] : memref<128x128xf32, #tpu.memory_space<vmem>>, vector<128x128xf32>
    %c0_4 = arith.constant 0 : index
    %c0_5 = arith.constant 0 : index
    %5 = vector.load %arg8[%c0_4, %c0_5] : memref<128x1xf32, #tpu.memory_space<vmem>>, vector<128x1xf32>
    %cst = arith.constant dense<0xFF800000> : vector<128xf32>
    %6 = vector.multi_reduction <maximumf>, %4, %cst [1] : vector<128x128xf32> to vector<128xf32>
    %7 = vector.shape_cast %6 : vector<128xf32> to vector<128x1xf32>
    %8 = arith.maximumf %5, %7 : vector<128x1xf32>
    %c0_6 = arith.constant 0 : index
    %c0_7 = arith.constant 0 : index
    %9 = vector.load %arg9[%c0_6, %c0_7] : memref<128x1xf32, #tpu.memory_space<vmem>>, vector<128x1xf32>
    %10 = arith.subf %5, %8 : vector<128x1xf32>
    %11 = math.exp %10 : vector<128x1xf32>
    %12 = arith.mulf %9, %11 : vector<128x1xf32>
    %13 = vector.broadcast %8 : vector<128x1xf32> to vector<128x128xf32>
    %14 = arith.subf %4, %13 : vector<128x128xf32>
    %15 = math.exp %14 : vector<128x128xf32>
    %cst_8 = arith.constant dense<0.000000e+00> : vector<128xf32>
    %16 = vector.multi_reduction <add>, %15, %cst_8 [1] : vector<128x128xf32> to vector<128xf32>
    %17 = vector.shape_cast %16 : vector<128xf32> to vector<128x1xf32>
    %18 = arith.addf %12, %17 : vector<128x1xf32>
    %c0_9 = arith.constant 0 : index
    %c0_10 = arith.constant 0 : index
    %19 = vector.load %arg9[%c0_9, %c0_10] : memref<128x1xf32, #tpu.memory_space<vmem>>, vector<128x1xf32>
    tpu.vector_store %arg9[%c0_9, %c0_10], %18 {strides = array<i32>} : memref<128x1xf32, #tpu.memory_space<vmem>>, vector<128x1xf32>,
    %c0_11 = arith.constant 0 : index
    %c0_12 = arith.constant 0 : index
    %20 = vector.load %arg8[%c0_11, %c0_12] : memref<128x1xf32, #tpu.memory_space<vmem>>, vector<128x1xf32>
    tpu.vector_store %arg8[%c0_11, %c0_12], %8 {strides = array<i32>} : memref<128x1xf32, #tpu.memory_space<vmem>>, vector<128x1xf32>,
    %21 = tpu.iota {dimensions = array<i32: 1>} : vector<128x128xi32>
    %c128_i32 = arith.constant 128 : i32
    %22 = arith.muli %arg1, %c128_i32 : i32
    %23 = vector.broadcast %22 : i32 to vector<128x128xi32>
    %24 = arith.addi %21, %23 : vector<128x128xi32>
    %c0_13 = arith.constant 0 : index
    %c0_14 = arith.constant 0 : index
    %25 = vector.load %arg10[%c0_13, %c0_14] : memref<128x1xf32, #tpu.memory_space<vmem>>, vector<128x1xf32>
    %26 = vector.broadcast %0 : vector<128x1xi32> to vector<128x128xi32>
    %27 = arith.cmpi eq, %24, %26 : vector<128x128xi32>
    %cst_15 = arith.constant 0.000000e+00 : f32
    %28 = vector.broadcast %cst_15 : f32 to vector<128x128xf32>
    %29 = arith.select %27, %4, %28 : vector<128x128xi1>, vector<128x128xf32>
    %cst_16 = arith.constant dense<0.000000e+00> : vector<128xf32>
    %30 = vector.multi_reduction <add>, %29, %cst_16 [1] : vector<128x128xf32> to vector<128xf32>
    %31 = vector.shape_cast %30 : vector<128xf32> to vector<128x1xf32>
    %32 = arith.addf %25, %31 : vector<128x1xf32>
    %c0_17 = arith.constant 0 : index
    %c0_18 = arith.constant 0 : index
    %33 = vector.load %arg10[%c0_17, %c0_18] : memref<128x1xf32, #tpu.memory_space<vmem>>, vector<128x1xf32>
    tpu.vector_store %arg10[%c0_17, %c0_18], %32 {strides = array<i32>} : memref<128x1xf32, #tpu.memory_space<vmem>>, vector<128x1xf32>,
    %c0_i32_19 = arith.constant 0 : i32
    %34 = arith.cmpi eq, %arg1, %c0_i32_19 : i32
    %35 = arith.extui %34 : i1 to i32
    %c0_i32_20 = arith.constant 0 : i32
    %36 = arith.cmpi ne, %35, %c0_i32_20 : i32
    scf.if %36 {
      %c128_i32_21 = arith.constant 128 : i32
      %37 = arith.muli %arg0, %c128_i32_21 : i32
      %38 = tpu.assume_multiple %37, 128 : i32
      %39 = arith.index_cast %38 : i32 to index
      %c0_22 = arith.constant 0 : index
      %40 = vector.load %arg2[%39, %c0_22] : memref<128x128xf32, #tpu.memory_space<vmem>>, vector<128x128xf32>
      %c0_23 = arith.constant 0 : index
      %c0_24 = arith.constant 0 : index
      %41 = vector.load %arg5[%c0_23, %c0_24] : memref<1x128xi32, #tpu.memory_space<vmem>>, vector<1x128xi32>
      %c0_25 = arith.constant 0 : index
      %c0_26 = arith.constant 0 : index
      %42 = vector.load %arg6[%c0_25, %c0_26] : memref<1x128xf32, #tpu.memory_space<vmem>>, vector<1x128xf32>
      %c0_27 = arith.constant 0 : index
      %c0_28 = arith.constant 0 : index
      %43 = vector.load %arg2[%c0_27, %c0_28] : memref<128x128xf32, #tpu.memory_space<vmem>>, vector<128x128xf32>
      %cst_29 = arith.constant dense<0.000000e+00> : vector<128x128xf32>
      %44 = tpu.matmul %40, %43, %cst_29 {dimension_numbers = #tpu.dot_dimension_numbers<[1], [1], [0], [0], [0, 0, 1, 0], [], []>} : vector<128x128xf32>, vector<128x128xf32>, vector<128x128xf32> -> vector<128x128xf32>
      %45 = vector.broadcast %0 : vector<128x1xi32> to vector<128x128xi32>
      %46 = vector.broadcast %41 : vector<1x128xi32> to vector<128x128xi32>
      %47 = arith.cmpi eq, %45, %46 : vector<128x128xi32>
      %cst_30 = arith.constant 1.000000e+30 : f32
      %48 = vector.broadcast %cst_30 : f32 to vector<128x128xf32>
      %49 = arith.select %47, %44, %48 : vector<128x128xi1>, vector<128x128xf32>
      %cst_31 = arith.constant dense<0x7F800000> : vector<128xf32>
      %50 = vector.multi_reduction <minimumf>, %49, %cst_31 [1] : vector<128x128xf32> to vector<128xf32>
      %51 = vector.shape_cast %50 : vector<128xf32> to vector<128x1xf32>
      %52 = vector.broadcast %42 : vector<1x128xf32> to vector<128x128xf32>
      %53 = arith.addf %44, %52 : vector<128x128xf32>
      %cst_32 = arith.constant -1.000000e+30 : f32
      %54 = vector.broadcast %cst_32 : f32 to vector<128x128xf32>
      %55 = arith.select %47, %54, %53 : vector<128x128xi1>, vector<128x128xf32>
      %cst_33 = arith.constant dense<0xFF800000> : vector<128xf32>
      %56 = vector.multi_reduction <maximumf>, %55, %cst_33 [1] : vector<128x128xf32> to vector<128xf32>
      %57 = vector.shape_cast %56 : vector<128xf32> to vector<128x1xf32>
      %58 = arith.subf %57, %51 : vector<128x1xf32>
      %cst_34 = arith.constant 5.000000e-01 : f32
      %59 = vector.broadcast %cst_34 : f32 to vector<128x1xf32>
      %60 = arith.addf %58, %59 : vector<128x1xf32>
      %cst_35 = arith.constant 0.000000e+00 : f32
      %61 = vector.broadcast %cst_35 : f32 to vector<128x1xf32>
      %62 = arith.maximumf %60, %61 : vector<128x1xf32>
      %cst_36 = arith.constant 8.000000e-01 : f32
      %63 = vector.broadcast %cst_36 : f32 to vector<128x1xf32>
      %64 = arith.subf %63, %51 : vector<128x1xf32>
      %cst_37 = arith.constant 0.000000e+00 : f32
      %65 = vector.broadcast %cst_37 : f32 to vector<128x1xf32>
      %66 = arith.maximumf %64, %65 : vector<128x1xf32>
      %cst_38 = arith.constant 4.000000e-01 : f32
      %67 = vector.broadcast %cst_38 : f32 to vector<128x1xf32>
      %68 = arith.subf %57, %67 : vector<128x1xf32>
      %cst_39 = arith.constant 0.000000e+00 : f32
      %69 = vector.broadcast %cst_39 : f32 to vector<128x1xf32>
      %70 = arith.cmpf ogt, %68, %69 : vector<128x1xf32>
      %cst_40 = arith.constant 1.000000e+00 : f32
      %71 = vector.broadcast %cst_40 : f32 to vector<128x1xf32>
      %72 = arith.select %70, %68, %71 : vector<128x1xi1>, vector<128x1xf32>
      %73 = arith.addf %66, %72 : vector<128x1xf32>
      %cst_41 = arith.constant 1.000000e+00 : f32
      %74 = vector.broadcast %cst_41 : f32 to vector<128x1xf32>
      %75 = arith.mulf %74, %73 : vector<128x1xf32>
      %76 = arith.addf %62, %75 : vector<128x1xf32>
      %c0_42 = arith.constant 0 : index
      %c0_43 = arith.constant 0 : index
      %77 = vector.load %arg10[%c0_42, %c0_43] : memref<128x1xf32, #tpu.memory_space<vmem>>, vector<128x1xf32>
      %c0_44 = arith.constant 0 : index
      %c0_45 = arith.constant 0 : index
      %78 = vector.load %arg8[%c0_44, %c0_45] : memref<128x1xf32, #tpu.memory_space<vmem>>, vector<128x1xf32>
      %c0_46 = arith.constant 0 : index
      %c0_47 = arith.constant 0 : index
      %79 = vector.load %arg9[%c0_46, %c0_47] : memref<128x1xf32, #tpu.memory_space<vmem>>, vector<128x1xf32>
      %80 = math.log %79 : vector<128x1xf32>
      %81 = arith.addf %78, %80 : vector<128x1xf32>
      %82 = arith.subf %81, %77 : vector<128x1xf32>
      %83 = arith.addf %76, %82 : vector<128x1xf32>
      %c0_i32_48 = arith.constant 0 : i32
      %84 = vector.broadcast %c0_i32_48 : i32 to vector<128x1xi32>
      %85 = arith.cmpi sge, %0, %84 : vector<128x1xi32>
      %cst_49 = arith.constant 0.000000e+00 : f32
      %86 = vector.broadcast %cst_49 : f32 to vector<128x1xf32>
      %87 = arith.select %85, %83, %86 : vector<128x1xi1>, vector<128x1xf32>
      %88 = vector.shape_cast %87 : vector<128x1xf32> to vector<1x128x1xf32>
      %cst_50 = arith.constant dense<0.000000e+00> : vector<1xf32>
      %89 = vector.multi_reduction <add>, %88, %cst_50 [1, 2] : vector<1x128x1xf32> to vector<1xf32>
      %90 = vector.shape_cast %89 : vector<1xf32> to vector<1x1x1xf32>
      %91 = vector.extract %90[0, 0, 0] : f32 from vector<1x1x1xf32>
      %c0_51 = arith.constant 0 : index
      %c0_52 = arith.constant 0 : index
      %92 = memref.load %arg7[%c0_51, %c0_52] : memref<1x1xf32, #tpu.memory_space<smem>>
      memref.store %91, %arg7[%c0_51, %c0_52] : memref<1x1xf32, #tpu.memory_space<smem>>
    } else {
    }
    return
  }
  func.func @transform_0(%arg0: i32, %arg1: i32) -> (i32, i32) {
    %c0_i32 = arith.constant 0 : i32
    %c0_i32_0 = arith.constant 0 : i32
    %c0_i32_1 = arith.constant 0 : i32
    return %c0_i32, %c0_i32_0 : i32, i32
  }
  func.func @transform_1(%arg0: i32, %arg1: i32) -> (i32, i32) {
    %c0_i32 = arith.constant 0 : i32
    return %arg0, %arg1 : i32, i32
  }
  func.func @transform_2(%arg0: i32, %arg1: i32) -> (i32, i32) {
    %c0_i32 = arith.constant 0 : i32
    %c0_i32_0 = arith.constant 0 : i32
    return %arg0, %c0_i32 : i32, i32
  }
  func.func @transform_3(%arg0: i32, %arg1: i32) -> (i32, i32) {
    %c0_i32 = arith.constant 0 : i32
    %c0_i32_0 = arith.constant 0 : i32
    %c0_i32_1 = arith.constant 0 : i32
    return %c0_i32, %c0_i32_0 : i32, i32
  }
  func.func @transform_4(%arg0: i32, %arg1: i32) -> (i32, i32) {
    %c0_i32 = arith.constant 0 : i32
    %c0_i32_0 = arith.constant 0 : i32
    %c0_i32_1 = arith.constant 0 : i32
    return %c0_i32, %c0_i32_0 : i32, i32
  }
  func.func @transform_5(%arg0: i32, %arg1: i32) -> (i32, i32) {
    %c0_i32 = arith.constant 0 : i32
    %c0_i32_0 = arith.constant 0 : i32
    return %arg0, %c0_i32 : i32, i32
  }
}

</mosaic_0001>

<llo_original>
// kernel: tpu_custom_call.1
$region0: #{tpu_custom_call.1}
  #allocation0 [shape = 'u32[]', space=smem, size = 0x4, offset = 0x4, fixed_abs, tag = 'smem constant byte address 0x4 - core index']
  #allocation1 [shape = 'u32[72,128]{1,0:T(1,128)}', space=vmem, size = 0x9000, scoped, tag = 'internal scratch']
  #allocation2 [shape = 'f32[128,1]{1,0:T(8,128)}', space=vmem, size = 0x10000, scoped, tag = 'scratch operand']
  #allocation3 [shape = 'f32[128,1]{1,0:T(8,128)}', space=vmem, size = 0x10000, scoped, tag = 'scratch operand']
  #allocation4 [shape = 'f32[128,1]{1,0:T(8,128)}', space=vmem, size = 0x10000, scoped, tag = 'scratch operand']
  #allocation5 [shape = 'f32[128,1]{1,0:T(8,128)}', space=vmem, size = 0x10000, scoped, tag = 'scratch operand']
  %s0 = inlined_call_operand.vmem [shape: f32[128,128], index: 0, kind: input, shape index: {}]
  %s1 = inlined_call_operand.hbm [shape: f32[128,128], index: 1, kind: input, shape index: {}]
  %s2 = inlined_call_operand.vmem [shape: s32[128,1], index: 2, kind: input, shape index: {}]
  %s3 = inlined_call_operand.vmem [shape: s32[1,128], index: 3, kind: input, shape index: {}]
  %s4 = inlined_call_operand.vmem [shape: f32[1,128], index: 4, kind: input, shape index: {}]
  %s5 = inlined_call_operand.hbm [shape: f32[1,1], index: 5, kind: output, shape index: {}]
  %s6 = sld [smem:[#allocation0]]
  $region42: #{tpu_custom_call.1} parent=0
    _
  %s8 = ssub.s32 1, %s6
  %s9 = scalar_select 0, %s8, %s6
  $region1: #{tpu_custom_call.1} parent=0
    #allocation6 [shape = 'u8[65536]{0}', space=vmem, size = 0x10000, scoped, tag = 'input window, operand 1, single buffered']
    #allocation7 [shape = 's32[1]{0}', space=sflag, size = 0x4, scoped, tag = 'scoped memory for tpu_custom_call.1']
    #allocation8 [shape = 's32[1]{0}', space=sflag, size = 0x4, scoped, tag = 'scoped memory for tpu_custom_call.1']
    #allocation9 [shape = 'u8[512]{0}', space=smem, size = 0x200, scoped, tag = 'output window, operand 0, single buffered']
    %10 = vsyncpa [#allocation7], 0
    %11 = vsyncpa [#allocation8], 0
    // Predicated region
    $region2: #{tpu_custom_call.1} parent=1 // pred_check
      _
    $region3: #{tpu_custom_call.1} parent=1 // pred_check_branch
      %13 = sbr.rel (0) target = $region5
    $region4: #{tpu_custom_call.1} parent=1 // pred_region
      _
    $region5: #{tpu_custom_call.1} parent=1 // pred_fallthru
      _
    // Predicated region
    $region6: #{tpu_custom_call.1} parent=1 // pred_check
      _
    $region7: #{tpu_custom_call.1} parent=1 // pred_check_branch
      %15 = sbr.rel (0) target = $region9
    $region8: #{tpu_custom_call.1} parent=1 // pred_region
      %17 = vsyncadd [#allocation7], 0
      %s18 = sshll.u32 %s1, 4
      %s19 = int_to_ptr.hbm [resolvable:$true] %s18
      %s20 = sshll.u32 [#allocation6], 4
      %s21 = int_to_ptr.vmem [resolvable:$true] %s20
      %26 = dma.hbm_to_vmem [thread:$0]  %s19, 2048, %s21, [#allocation7], 128, 128, 8
    $region9: #{tpu_custom_call.1} parent=1 // pred_fallthru
      _
    // Predicated region
    $region10: #{tpu_custom_call.1} parent=1 // pred_check
      _
    $region11: #{tpu_custom_call.1} parent=1 // pred_check_branch
      %28 = sbr.rel (0) target = $region13
    $region12: #{tpu_custom_call.1} parent=1 // pred_region
      _
    $region13: #{tpu_custom_call.1} parent=1 // pred_fallthru
      _
    // Predicated region
    $region14: #{tpu_custom_call.1} parent=1 // pred_check
      _
    $region15: #{tpu_custom_call.1} parent=1 // pred_check_branch
      %30 = sbr.rel (0) target = $region17
    $region16: #{tpu_custom_call.1} parent=1 // pred_region
      _
    $region17: #{tpu_custom_call.1} parent=1 // pred_fallthru
      _
    // Predicated region
    $region18: #{tpu_custom_call.1} parent=1 // pred_check
      _
    $region19: #{tpu_custom_call.1} parent=1 // pred_check_branch
      %32 = sbr.rel (0) target = $region21
    $region20: #{tpu_custom_call.1} parent=1 // pred_region
      _
    $region21: #{tpu_custom_call.1} parent=1 // pred_fallthru
      _
    // Predicated region
    $region22: #{tpu_custom_call.1} parent=1 // pred_check
      _
    $region23: #{tpu_custom_call.1} parent=1 // pred_check_branch
      %34 = sbr.rel (0) target = $region25
    $region24: #{tpu_custom_call.1} parent=1 // pred_region
      %36 = dma.done [#allocation7], 2048
    $region25: #{tpu_custom_call.1} parent=1 // pred_fallthru
      _
    %v37 = vld [vmem:[%s2] sm:$0xff]
    %v38 = vld [vmem:[%s2 + $0x8] sm:$0xff]
    %v39 = vld [vmem:[%s2 + $0x10] sm:$0xff]
    %v40 = vld [vmem:[%s2 + $0x18] sm:$0xff]
    %v41 = vld [vmem:[%s2 + $0x20] sm:$0xff]
    %v42 = vld [vmem:[%s2 + $0x28] sm:$0xff]
    %v43 = vld [vmem:[%s2 + $0x30] sm:$0xff]
    %v44 = vld [vmem:[%s2 + $0x38] sm:$0xff]
    %v45 = vld [vmem:[%s2 + $0x40] sm:$0xff]
    %v46 = vld [vmem:[%s2 + $0x48] sm:$0xff]
    %v47 = vld [vmem:[%s2 + $0x50] sm:$0xff]
    %v48 = vld [vmem:[%s2 + $0x58] sm:$0xff]
    %v49 = vld [vmem:[%s2 + $0x60] sm:$0xff]
    %v50 = vld [vmem:[%s2 + $0x68] sm:$0xff]
    %v51 = vld [vmem:[%s2 + $0x70] sm:$0xff]
    %v52 = vld [vmem:[%s2 + $0x78] sm:$0xff]
    %p53 = scmp.eq.s32.totalorder 0, 0
    // Predicated region
    $region26: #{tpu_custom_call.1} parent=1 // pred_check
      %p54 = pneg %p53
    $region27: #{tpu_custom_call.1} parent=1 // pred_check_branch
      %56 = sbr.rel (%p54) target = $region29
    $region28: #{tpu_custom_call.1} parent=1 // pred_region
      %vm57 = vcmask 7168
      %58 = vst.msk [vmem:[#allocation2] sm:$0xff] %vm57, -1e+30
      %59 = vst.msk [vmem:[#allocation2 + $0x8] sm:$0xff] %vm57, -1e+30
      %60 = vst.msk [vmem:[#allocation2 + $0x10] sm:$0xff] %vm57, -1e+30
      %61 = vst.msk [vmem:[#allocation2 + $0x18] sm:$0xff] %vm57, -1e+30
      %62 = vst.msk [vmem:[#allocation2 + $0x20] sm:$0xff] %vm57, -1e+30
      %63 = vst.msk [vmem:[#allocation2 + $0x28] sm:$0xff] %vm57, -1e+30
      %64 = vst.msk [vmem:[#allocation2 + $0x30] sm:$0xff] %vm57, -1e+30
      %65 = vst.msk [vmem:[#allocation2 + $0x38] sm:$0xff] %vm57, -1e+30
      %66 = vst.msk [vmem:[#allocation2 + $0x40] sm:$0xff] %vm57, -1e+30
      %67 = vst.msk [vmem:[#allocation2 + $0x48] sm:$0xff] %vm57, -1e+30
      %68 = vst.msk [vmem:[#allocation2 + $0x50] sm:$0xff] %vm57, -1e+30
      %69 = vst.msk [vmem:[#allocation2 + $0x58] sm:$0xff] %vm57, -1e+30
      %70 = vst.msk [vmem:[#allocation2 + $0x60] sm:$0xff] %vm57, -1e+30
      %71 = vst.msk [vmem:[#allocation2 + $0x68] sm:$0xff] %vm57, -1e+30
      %72 = vst.msk [vmem:[#allocation2 + $0x70] sm:$0xff] %vm57, -1e+30
      %73 = vst.msk [vmem:[#allocation2 + $0x78] sm:$0xff] %vm57, -1e+30
      %74 = vst.msk [vmem:[#allocation3] sm:$0xff] %vm57, 0.0
      %75 = vst.msk [vmem:[#allocation3 + $0x8] sm:$0xff] %vm57, 0.0
      %76 = vst.msk [vmem:[#allocation3 + $0x10] sm:$0xff] %vm57, 0.0
      %77 = vst.msk [vmem:[#allocation3 + $0x18] sm:$0xff] %vm57, 0.0
      %78 = vst.msk [vmem:[#allocation3 + $0x20] sm:$0xff] %vm57, 0.0
      %79 = vst.msk [vmem:[#allocation3 + $0x28] sm:$0xff] %vm57, 0.0
      %80 = vst.msk [vmem:[#allocation3 + $0x30] sm:$0xff] %vm57, 0.0
      %81 = vst.msk [vmem:[#allocation3 + $0x38] sm:$0xff] %vm57, 0.0
      %82 = vst.msk [vmem:[#allocation3 + $0x40] sm:$0xff] %vm57, 0.0
      %83 = vst.msk [vmem:[#allocation3 + $0x48] sm:$0xff] %vm57, 0.0
      %84 = vst.msk [vmem:[#allocation3 + $0x50] sm:$0xff] %vm57, 0.0
      %85 = vst.msk [vmem:[#allocation3 + $0x58] sm:$0xff] %vm57, 0.0
      %86 = vst.msk [vmem:[#allocation3 + $0x60] sm:$0xff] %vm57, 0.0
      %87 = vst.msk [vmem:[#allocation3 + $0x68] sm:$0xff] %vm57, 0.0
      %88 = vst.msk [vmem:[#allocation3 + $0x70] sm:$0xff] %vm57, 0.0
      %89 = vst.msk [vmem:[#allocation3 + $0x78] sm:$0xff] %vm57, 0.0
      %90 = vst.msk [vmem:[#allocation4] sm:$0xff] %vm57, 0.0
      %91 = vst.msk [vmem:[#allocation4 + $0x8] sm:$0xff] %vm57, 0.0
      %92 = vst.msk [vmem:[#allocation4 + $0x10] sm:$0xff] %vm57, 0.0
      %93 = vst.msk [vmem:[#allocation4 + $0x18] sm:$0xff] %vm57, 0.0
      %94 = vst.msk [vmem:[#allocation4 + $0x20] sm:$0xff] %vm57, 0.0
      %95 = vst.msk [vmem:[#allocation4 + $0x28] sm:$0xff] %vm57, 0.0
      %96 = vst.msk [vmem:[#allocation4 + $0x30] sm:$0xff] %vm57, 0.0
      %97 = vst.msk [vmem:[#allocation4 + $0x38] sm:$0xff] %vm57, 0.0
      %98 = vst.msk [vmem:[#allocation4 + $0x40] sm:$0xff] %vm57, 0.0
      %99 = vst.msk [vmem:[#allocation4 + $0x48] sm:$0xff] %vm57, 0.0
      %100 = vst.msk [vmem:[#allocation4 + $0x50] sm:$0xff] %vm57, 0.0
      %101 = vst.msk [vmem:[#allocation4 + $0x58] sm:$0xff] %vm57, 0.0
      %102 = vst.msk [vmem:[#allocation4 + $0x60] sm:$0xff] %vm57, 0.0
      %103 = vst.msk [vmem:[#allocation4 + $0x68] sm:$0xff] %vm57, 0.0
      %104 = vst.msk [vmem:[#allocation4 + $0x70] sm:$0xff] %vm57, 0.0
      %105 = vst.msk [vmem:[#allocation4 + $0x78] sm:$0xff] %vm57, 0.0
      %106 = vst.msk [vmem:[#allocation5] sm:$0xff] %vm57, 0.0
      %107 = vst.msk [vmem:[#allocation5 + $0x8] sm:$0xff] %vm57, 0.0
      %108 = vst.msk [vmem:[#allocation5 + $0x10] sm:$0xff] %vm57, 0.0
      %109 = vst.msk [vmem:[#allocation5 + $0x18] sm:$0xff] %vm57, 0.0
      %110 = vst.msk [vmem:[#allocation5 + $0x20] sm:$0xff] %vm57, 0.0
      %111 = vst.msk [vmem:[#allocation5 + $0x28] sm:$0xff] %vm57, 0.0
      %112 = vst.msk [vmem:[#allocation5 + $0x30] sm:$0xff] %vm57, 0.0
      %113 = vst.msk [vmem:[#allocation5 + $0x38] sm:$0xff] %vm57, 0.0
      %114 = vst.msk [vmem:[#allocation5 + $0x40] sm:$0xff] %vm57, 0.0
      %115 = vst.msk [vmem:[#allocation5 + $0x48] sm:$0xff] %vm57, 0.0
      %116 = vst.msk [vmem:[#allocation5 + $0x50] sm:$0xff] %vm57, 0.0
      %117 = vst.msk [vmem:[#allocation5 + $0x58] sm:$0xff] %vm57, 0.0
      %118 = vst.msk [vmem:[#allocation5 + $0x60] sm:$0xff] %vm57, 0.0
      %119 = vst.msk [vmem:[#allocation5 + $0x68] sm:$0xff] %vm57, 0.0
      %120 = vst.msk [vmem:[#allocation5 + $0x70] sm:$0xff] %vm57, 0.0
      %121 = vst.msk [vmem:[#allocation5 + $0x78] sm:$0xff] %vm57, 0.0
    $region29: #{tpu_custom_call.1} parent=1 // pred_fallthru
      _
    %v122 = vld [vmem:[#allocation6] sm:$0xff]
    %v123 = vld [vmem:[#allocation6 + $0x8] sm:$0xff]
    %v124 = vld [vmem:[#allocation6 + $0x10] sm:$0xff]
    %v125 = vld [vmem:[#allocation6 + $0x18] sm:$0xff]
    %v126 = vld [vmem:[#allocation6 + $0x20] sm:$0xff]
    %v127 = vld [vmem:[#allocation6 + $0x28] sm:$0xff]
    %v128 = vld [vmem:[#allocation6 + $0x30] sm:$0xff]
    %v129 = vld [vmem:[#allocation6 + $0x38] sm:$0xff]
    %v130 = vld [vmem:[#allocation6 + $0x40] sm:$0xff]
    %v131 = vld [vmem:[#allocation6 + $0x48] sm:$0xff]
    %v132 = vld [vmem:[#allocation6 + $0x50] sm:$0xff]
    %v133 = vld [vmem:[#allocation6 + $0x58] sm:$0xff]
    %v134 = vld [vmem:[#allocation6 + $0x60] sm:$0xff]
    %v135 = vld [vmem:[#allocation6 + $0x68] sm:$0xff]
    %v136 = vld [vmem:[#allocation6 + $0x70] sm:$0xff]
    %v137 = vld [vmem:[#allocation6 + $0x78] sm:$0xff]
    %v138 = vld [vmem:[#allocation2] sm:$0xff]
    %v139 = vld [vmem:[#allocation2 + $0x8] sm:$0xff]
    %v140 = vld [vmem:[#allocation2 + $0x10] sm:$0xff]
    %v141 = vld [vmem:[#allocation2 + $0x18] sm:$0xff]
    %v142 = vld [vmem:[#allocation2 + $0x20] sm:$0xff]
    %v143 = vld [vmem:[#allocation2 + $0x28] sm:$0xff]
    %v144 = vld [vmem:[#allocation2 + $0x30] sm:$0xff]
    %v145 = vld [vmem:[#allocation2 + $0x38] sm:$0xff]
    %v146 = vld [vmem:[#allocation2 + $0x40] sm:$0xff]
    %v147 = vld [vmem:[#allocation2 + $0x48] sm:$0xff]
    %v148 = vld [vmem:[#allocation2 + $0x50] sm:$0xff]
    %v149 = vld [vmem:[#allocation2 + $0x58] sm:$0xff]
    %v150 = vld [vmem:[#allocation2 + $0x60] sm:$0xff]
    %v151 = vld [vmem:[#allocation2 + $0x68] sm:$0xff]
    %v152 = vld [vmem:[#allocation2 + $0x70] sm:$0xff]
    %v153 = vld [vmem:[#allocation2 + $0x78] sm:$0xff]
    %154 = vmax.xlane.f32.xlu0 %v122
    %v155 = vpop.xlane.xlu0 %154
    %156 = vmax.xlane.f32.xlu0 %v123
    %v157 = vpop.xlane.xlu0 %156
    %158 = vmax.xlane.f32.xlu0 %v124
    %v159 = vpop.xlane.xlu0 %158
    %160 = vmax.xlane.f32.xlu0 %v125
    %v161 = vpop.xlane.xlu0 %160
    %162 = vmax.xlane.f32.xlu0 %v126
    %v163 = vpop.xlane.xlu0 %162
    %164 = vmax.xlane.f32.xlu0 %v127
    %v165 = vpop.xlane.xlu0 %164
    %166 = vmax.xlane.f32.xlu0 %v128
    %v167 = vpop.xlane.xlu0 %166
    %168 = vmax.xlane.f32.xlu0 %v129
    %v169 = vpop.xlane.xlu0 %168
    %170 = vmax.xlane.f32.xlu0 %v130
    %v171 = vpop.xlane.xlu0 %170
    %172 = vmax.xlane.f32.xlu0 %v131
    %v173 = vpop.xlane.xlu0 %172
    %174 = vmax.xlane.f32.xlu0 %v132
    %v175 = vpop.xlane.xlu0 %174
    %176 = vmax.xlane.f32.xlu0 %v133
    %v177 = vpop.xlane.xlu0 %176
    %178 = vmax.xlane.f32.xlu0 %v134
    %v179 = vpop.xlane.xlu0 %178
    %180 = vmax.xlane.f32.xlu0 %v135
    %v181 = vpop.xlane.xlu0 %180
    %182 = vmax.xlane.f32.xlu0 %v136
    %v183 = vpop.xlane.xlu0 %182
    %184 = vmax.xlane.f32.xlu0 %v137
    %v185 = vpop.xlane.xlu0 %184
    %v186 = vmax.f32 %v138, %v155
    %v187 = vmax.f32 %v139, %v157
    %v188 = vmax.f32 %v140, %v159
    %v189 = vmax.f32 %v141, %v161
    %v190 = vmax.f32 %v142, %v163
    %v191 = vmax.f32 %v143, %v165
    %v192 = vmax.f32 %v144, %v167
    %v193 = vmax.f32 %v145, %v169
    %v194 = vmax.f32 %v146, %v171
    %v195 = vmax.f32 %v147, %v173
    %v196 = vmax.f32 %v148, %v175
    %v197 = vmax.f32 %v149, %v177
    %v198 = vmax.f32 %v150, %v179
    %v199 = vmax.f32 %v151, %v181
    %v200 = vmax.f32 %v152, %v183
    %v201 = vmax.f32 %v153, %v185
    %v202 = vld [vmem:[#allocation3] sm:$0xff]
    %v203 = vld [vmem:[#allocation3 + $0x8] sm:$0xff]
    %v204 = vld [vmem:[#allocation3 + $0x10] sm:$0xff]
    %v205 = vld [vmem:[#allocation3 + $0x18] sm:$0xff]
    %v206 = vld [vmem:[#allocation3 + $0x20] sm:$0xff]
    %v207 = vld [vmem:[#allocation3 + $0x28] sm:$0xff]
    %v208 = vld [vmem:[#allocation3 + $0x30] sm:$0xff]
    %v209 = vld [vmem:[#allocation3 + $0x38] sm:$0xff]
    %v210 = vld [vmem:[#allocation3 + $0x40] sm:$0xff]
    %v211 = vld [vmem:[#allocation3 + $0x48] sm:$0xff]
    %v212 = vld [vmem:[#allocation3 + $0x50] sm:$0xff]
    %v213 = vld [vmem:[#allocation3 + $0x58] sm:$0xff]
    %v214 = vld [vmem:[#allocation3 + $0x60] sm:$0xff]
    %v215 = vld [vmem:[#allocation3 + $0x68] sm:$0xff]
    %v216 = vld [vmem:[#allocation3 + $0x70] sm:$0xff]
    %v217 = vld [vmem:[#allocation3 + $0x78] sm:$0xff]
    %v218 = vsub.f32 %v138, %v186
    %v219 = vsub.f32 %v139, %v187
    %v220 = vsub.f32 %v140, %v188
    %v221 = vsub.f32 %v141, %v189
    %v222 = vsub.f32 %v142, %v190
    %v223 = vsub.f32 %v143, %v191
    %v224 = vsub.f32 %v144, %v192
    %v225 = vsub.f32 %v145, %v193
    %v226 = vsub.f32 %v146, %v194
    %v227 = vsub.f32 %v147, %v195
    %v228 = vsub.f32 %v148, %v196
    %v229 = vsub.f32 %v149, %v197
    %v230 = vsub.f32 %v150, %v198
    %v231 = vsub.f32 %v151, %v199
    %v232 = vsub.f32 %v152, %v200
    %v233 = vsub.f32 %v153, %v201
    %v234 = vmul.f32 %v218, 1.442695
    %v235 = vpow.pop %v234
    %v236 = vmul.f32 %v219, 1.442695
    %v237 = vpow.pop %v236
    %v238 = vmul.f32 %v220, 1.442695
    %v239 = vpow.pop %v238
    %v240 = vmul.f32 %v221, 1.442695
    %v241 = vpow.pop %v240
    %v242 = vmul.f32 %v222, 1.442695
    %v243 = vpow.pop %v242
    %v244 = vmul.f32 %v223, 1.442695
    %v245 = vpow.pop %v244
    %v246 = vmul.f32 %v224, 1.442695
    %v247 = vpow.pop %v246
    %v248 = vmul.f32 %v225, 1.442695
    %v249 = vpow.pop %v248
    %v250 = vmul.f32 %v226, 1.442695
    %v251 = vpow.pop %v250
    %v252 = vmul.f32 %v227, 1.442695
    %v253 = vpow.pop %v252
    %v254 = vmul.f32 %v228, 1.442695
    %v255 = vpow.pop %v254
    %v256 = vmul.f32 %v229, 1.442695
    %v257 = vpow.pop %v256
    %v258 = vmul.f32 %v230, 1.442695
    %v259 = vpow.pop %v258
    %v260 = vmul.f32 %v231, 1.442695
    %v261 = vpow.pop %v260
    %v262 = vmul.f32 %v232, 1.442695
    %v263 = vpow.pop %v262
    %v264 = vmul.f32 %v233, 1.442695
    %v265 = vpow.pop %v264
    %v266 = vmul.f32 %v202, %v235
    %v267 = vmul.f32 %v203, %v237
    %v268 = vmul.f32 %v204, %v239
    %v269 = vmul.f32 %v205, %v241
    %v270 = vmul.f32 %v206, %v243
    %v271 = vmul.f32 %v207, %v245
    %v272 = vmul.f32 %v208, %v247
    %v273 = vmul.f32 %v209, %v249
    %v274 = vmul.f32 %v210, %v251
    %v275 = vmul.f32 %v211, %v253
    %v276 = vmul.f32 %v212, %v255
    %v277 = vmul.f32 %v213, %v257
    %v278 = vmul.f32 %v214, %v259
    %v279 = vmul.f32 %v215, %v261
    %v280 = vmul.f32 %v216, %v263
    %v281 = vmul.f32 %v217, %v265
    %283 = vset.pattern.permute.xlu0 0
    %284 = vperm.xlu0 %283, %v186
    %v285 = vpop.permute.xlu0 %284
    %288 = vset.pattern.permute.xlu0 0
    %289 = vperm.xlu0 %288, %v187
    %v290 = vpop.permute.xlu0 %289
    %293 = vset.pattern.permute.xlu0 0
    %294 = vperm.xlu0 %293, %v188
    %v295 = vpop.permute.xlu0 %294
    %298 = vset.pattern.permute.xlu0 0
    %299 = vperm.xlu0 %298, %v189
    %v300 = vpop.permute.xlu0 %299
    %303 = vset.pattern.permute.xlu0 0
    %304 = vperm.xlu0 %303, %v190
    %v305 = vpop.permute.xlu0 %304
    %308 = vset.pattern.permute.xlu0 0
    %309 = vperm.xlu0 %308, %v191
    %v310 = vpop.permute.xlu0 %309
    %313 = vset.pattern.permute.xlu0 0
    %314 = vperm.xlu0 %313, %v192
    %v315 = vpop.permute.xlu0 %314
    %318 = vset.pattern.permute.xlu0 0
    %319 = vperm.xlu0 %318, %v193
    %v320 = vpop.permute.xlu0 %319
    %323 = vset.pattern.permute.xlu0 0
    %324 = vperm.xlu0 %323, %v194
    %v325 = vpop.permute.xlu0 %324
    %328 = vset.pattern.permute.xlu0 0
    %329 = vperm.xlu0 %328, %v195
    %v330 = vpop.permute.xlu0 %329
    %333 = vset.pattern.permute.xlu0 0
    %334 = vperm.xlu0 %333, %v196
    %v335 = vpop.permute.xlu0 %334
    %338 = vset.pattern.permute.xlu0 0
    %339 = vperm.xlu0 %338, %v197
    %v340 = vpop.permute.xlu0 %339
    %343 = vset.pattern.permute.xlu0 0
    %344 = vperm.xlu0 %343, %v198
    %v345 = vpop.permute.xlu0 %344
    %348 = vset.pattern.permute.xlu0 0
    %349 = vperm.xlu0 %348, %v199
    %v350 = vpop.permute.xlu0 %349
    %353 = vset.pattern.permute.xlu0 0
    %354 = vperm.xlu0 %353, %v200
    %v355 = vpop.permute.xlu0 %354
    %358 = vset.pattern.permute.xlu0 0
    %359 = vperm.xlu0 %358, %v201
    %v360 = vpop.permute.xlu0 %359
    %v362 = vsub.f32 %v122, %v285
    %v363 = vsub.f32 %v123, %v290
    %v364 = vsub.f32 %v124, %v295
    %v365 = vsub.f32 %v125, %v300
    %v366 = vsub.f32 %v126, %v305
    %v367 = vsub.f32 %v127, %v310
    %v368 = vsub.f32 %v128, %v315
    %v369 = vsub.f32 %v129, %v320
    %v370 = vsub.f32 %v130, %v325
    %v371 = vsub.f32 %v131, %v330
    %v372 = vsub.f32 %v132, %v335
    %v373 = vsub.f32 %v133, %v340
    %v374 = vsub.f32 %v134, %v345
    %v375 = vsub.f32 %v135, %v350
    %v376 = vsub.f32 %v136, %v355
    %v377 = vsub.f32 %v137, %v360
    %v378 = vmul.f32 %v362, 1.442695
    %v379 = vpow.pop %v378
    %v380 = vmul.f32 %v363, 1.442695
    %v381 = vpow.pop %v380
    %v382 = vmul.f32 %v364, 1.442695
    %v383 = vpow.pop %v382
    %v384 = vmul.f32 %v365, 1.442695
    %v385 = vpow.pop %v384
    %v386 = vmul.f32 %v366, 1.442695
    %v387 = vpow.pop %v386
    %v388 = vmul.f32 %v367, 1.442695
    %v389 = vpow.pop %v388
    %v390 = vmul.f32 %v368, 1.442695
    %v391 = vpow.pop %v390
    %v392 = vmul.f32 %v369, 1.442695
    %v393 = vpow.pop %v392
    %v394 = vmul.f32 %v370, 1.442695
    %v395 = vpow.pop %v394
    %v396 = vmul.f32 %v371, 1.442695
    %v397 = vpow.pop %v396
    %v398 = vmul.f32 %v372, 1.442695
    %v399 = vpow.pop %v398
    %v400 = vmul.f32 %v373, 1.442695
    %v401 = vpow.pop %v400
    %v402 = vmul.f32 %v374, 1.442695
    %v403 = vpow.pop %v402
    %v404 = vmul.f32 %v375, 1.442695
    %v405 = vpow.pop %v404
    %v406 = vmul.f32 %v376, 1.442695
    %v407 = vpow.pop %v406
    %v408 = vmul.f32 %v377, 1.442695
    %v409 = vpow.pop %v408
    %410 = vadd.xlane.f32.xlu0 %v379
    %v411 = vpop.xlane.xlu0 %410
    %412 = vadd.xlane.f32.xlu0 %v381
    %v413 = vpop.xlane.xlu0 %412
    %414 = vadd.xlane.f32.xlu0 %v383
    %v415 = vpop.xlane.xlu0 %414
    %416 = vadd.xlane.f32.xlu0 %v385
    %v417 = vpop.xlane.xlu0 %416
    %418 = vadd.xlane.f32.xlu0 %v387
    %v419 = vpop.xlane.xlu0 %418
    %420 = vadd.xlane.f32.xlu0 %v389
    %v421 = vpop.xlane.xlu0 %420
    %422 = vadd.xlane.f32.xlu0 %v391
    %v423 = vpop.xlane.xlu0 %422
    %424 = vadd.xlane.f32.xlu0 %v393
    %v425 = vpop.xlane.xlu0 %424
    %426 = vadd.xlane.f32.xlu0 %v395
    %v427 = vpop.xlane.xlu0 %426
    %428 = vadd.xlane.f32.xlu0 %v397
    %v429 = vpop.xlane.xlu0 %428
    %430 = vadd.xlane.f32.xlu0 %v399
    %v431 = vpop.xlane.xlu0 %430
    %432 = vadd.xlane.f32.xlu0 %v401
    %v433 = vpop.xlane.xlu0 %432
    %434 = vadd.xlane.f32.xlu0 %v403
    %v435 = vpop.xlane.xlu0 %434
    %436 = vadd.xlane.f32.xlu0 %v405
    %v437 = vpop.xlane.xlu0 %436
    %438 = vadd.xlane.f32.xlu0 %v407
    %v439 = vpop.xlane.xlu0 %438
    %440 = vadd.xlane.f32.xlu0 %v409
    %v441 = vpop.xlane.xlu0 %440
    %v442 = vadd.f32 %v266, %v411
    %v443 = vadd.f32 %v267, %v413
    %v444 = vadd.f32 %v268, %v415
    %v445 = vadd.f32 %v269, %v417
    %v446 = vadd.f32 %v270, %v419
    %v447 = vadd.f32 %v271, %v421
    %v448 = vadd.f32 %v272, %v423
    %v449 = vadd.f32 %v273, %v425
    %v450 = vadd.f32 %v274, %v427
    %v451 = vadd.f32 %v275, %v429
    %v452 = vadd.f32 %v276, %v431
    %v453 = vadd.f32 %v277, %v433
    %v454 = vadd.f32 %v278, %v435
    %v455 = vadd.f32 %v279, %v437
    %v456 = vadd.f32 %v280, %v439
    %v457 = vadd.f32 %v281, %v441
    %vm458 = vcmask 7168
    %459 = vst.msk [vmem:[#allocation3] sm:$0xff] %vm458, %v442
    %460 = vst.msk [vmem:[#allocation3 + $0x8] sm:$0xff] %vm458, %v443
    %461 = vst.msk [vmem:[#allocation3 + $0x10] sm:$0xff] %vm458, %v444
    %462 = vst.msk [vmem:[#allocation3 + $0x18] sm:$0xff] %vm458, %v445
    %463 = vst.msk [vmem:[#allocation3 + $0x20] sm:$0xff] %vm458, %v446
    %464 = vst.msk [vmem:[#allocation3 + $0x28] sm:$0xff] %vm458, %v447
    %465 = vst.msk [vmem:[#allocation3 + $0x30] sm:$0xff] %vm458, %v448
    %466 = vst.msk [vmem:[#allocation3 + $0x38] sm:$0xff] %vm458, %v449
    %467 = vst.msk [vmem:[#allocation3 + $0x40] sm:$0xff] %vm458, %v450
    %468 = vst.msk [vmem:[#allocation3 + $0x48] sm:$0xff] %vm458, %v451
    %469 = vst.msk [vmem:[#allocation3 + $0x50] sm:$0xff] %vm458, %v452
    %470 = vst.msk [vmem:[#allocation3 + $0x58] sm:$0xff] %vm458, %v453
    %471 = vst.msk [vmem:[#allocation3 + $0x60] sm:$0xff] %vm458, %v454
    %472 = vst.msk [vmem:[#allocation3 + $0x68] sm:$0xff] %vm458, %v455
    %473 = vst.msk [vmem:[#allocation3 + $0x70] sm:$0xff] %vm458, %v456
    %474 = vst.msk [vmem:[#allocation3 + $0x78] sm:$0xff] %vm458, %v457
    %475 = vst.msk [vmem:[#allocation2] sm:$0xff] %vm458, %v186
    %476 = vst.msk [vmem:[#allocation2 + $0x8] sm:$0xff] %vm458, %v187
    %477 = vst.msk [vmem:[#allocation2 + $0x10] sm:$0xff] %vm458, %v188
    %478 = vst.msk [vmem:[#allocation2 + $0x18] sm:$0xff] %vm458, %v189
    %479 = vst.msk [vmem:[#allocation2 + $0x20] sm:$0xff] %vm458, %v190
    %480 = vst.msk [vmem:[#allocation2 + $0x28] sm:$0xff] %vm458, %v191
    %481 = vst.msk [vmem:[#allocation2 + $0x30] sm:$0xff] %vm458, %v192
    %482 = vst.msk [vmem:[#allocation2 + $0x38] sm:$0xff] %vm458, %v193
    %483 = vst.msk [vmem:[#allocation2 + $0x40] sm:$0xff] %vm458, %v194
    %484 = vst.msk [vmem:[#allocation2 + $0x48] sm:$0xff] %vm458, %v195
    %485 = vst.msk [vmem:[#allocation2 + $0x50] sm:$0xff] %vm458, %v196
    %486 = vst.msk [vmem:[#allocation2 + $0x58] sm:$0xff] %vm458, %v197
    %487 = vst.msk [vmem:[#allocation2 + $0x60] sm:$0xff] %vm458, %v198
    %488 = vst.msk [vmem:[#allocation2 + $0x68] sm:$0xff] %vm458, %v199
    %489 = vst.msk [vmem:[#allocation2 + $0x70] sm:$0xff] %vm458, %v200
    %490 = vst.msk [vmem:[#allocation2 + $0x78] sm:$0xff] %vm458, %v201
    %v491 = vlaneseq
    %v492 = vand.u32 %v491, 127
    %s493 = smul.u32 0, 128
    %v494 = vstv %s493
    %v495 = vadd.s32 %v492, %v494
    %v496 = vld [vmem:[#allocation4] sm:$0xff]
    %v497 = vld [vmem:[#allocation4 + $0x8] sm:$0xff]
    %v498 = vld [vmem:[#allocation4 + $0x10] sm:$0xff]
    %v499 = vld [vmem:[#allocation4 + $0x18] sm:$0xff]
    %v500 = vld [vmem:[#allocation4 + $0x20] sm:$0xff]
    %v501 = vld [vmem:[#allocation4 + $0x28] sm:$0xff]
    %v502 = vld [vmem:[#allocation4 + $0x30] sm:$0xff]
    %v503 = vld [vmem:[#allocation4 + $0x38] sm:$0xff]
    %v504 = vld [vmem:[#allocation4 + $0x40] sm:$0xff]
    %v505 = vld [vmem:[#allocation4 + $0x48] sm:$0xff]
    %v506 = vld [vmem:[#allocation4 + $0x50] sm:$0xff]
    %v507 = vld [vmem:[#allocation4 + $0x58] sm:$0xff]
    %v508 = vld [vmem:[#allocation4 + $0x60] sm:$0xff]
    %v509 = vld [vmem:[#allocation4 + $0x68] sm:$0xff]
    %v510 = vld [vmem:[#allocation4 + $0x70] sm:$0xff]
    %v511 = vld [vmem:[#allocation4 + $0x78] sm:$0xff]
    %512 = vset.pattern.permute.xlu0 0
    %513 = vperm.xlu0 %512, %v37
    %v514 = vpop.permute.xlu0 %513
    %515 = vset.pattern.permute.xlu0 0
    %516 = vperm.xlu0 %515, %v38
    %v517 = vpop.permute.xlu0 %516
    %518 = vset.pattern.permute.xlu0 0
    %519 = vperm.xlu0 %518, %v39
    %v520 = vpop.permute.xlu0 %519
    %521 = vset.pattern.permute.xlu0 0
    %522 = vperm.xlu0 %521, %v40
    %v523 = vpop.permute.xlu0 %522
    %524 = vset.pattern.permute.xlu0 0
    %525 = vperm.xlu0 %524, %v41
    %v526 = vpop.permute.xlu0 %525
    %527 = vset.pattern.permute.xlu0 0
    %528 = vperm.xlu0 %527, %v42
    %v529 = vpop.permute.xlu0 %528
    %530 = vset.pattern.permute.xlu0 0
    %531 = vperm.xlu0 %530, %v43
    %v532 = vpop.permute.xlu0 %531
    %533 = vset.pattern.permute.xlu0 0
    %534 = vperm.xlu0 %533, %v44
    %v535 = vpop.permute.xlu0 %534
    %536 = vset.pattern.permute.xlu0 0
    %537 = vperm.xlu0 %536, %v45
    %v538 = vpop.permute.xlu0 %537
    %539 = vset.pattern.permute.xlu0 0
    %540 = vperm.xlu0 %539, %v46
    %v541 = vpop.permute.xlu0 %540
    %542 = vset.pattern.permute.xlu0 0
    %543 = vperm.xlu0 %542, %v47
    %v544 = vpop.permute.xlu0 %543
    %545 = vset.pattern.permute.xlu0 0
    %546 = vperm.xlu0 %545, %v48
    %v547 = vpop.permute.xlu0 %546
    %548 = vset.pattern.permute.xlu0 0
    %549 = vperm.xlu0 %548, %v49
    %v550 = vpop.permute.xlu0 %549
    %551 = vset.pattern.permute.xlu0 0
    %552 = vperm.xlu0 %551, %v50
    %v553 = vpop.permute.xlu0 %552
    %554 = vset.pattern.permute.xlu0 0
    %555 = vperm.xlu0 %554, %v51
    %v556 = vpop.permute.xlu0 %555
    %557 = vset.pattern.permute.xlu0 0
    %558 = vperm.xlu0 %557, %v52
    %v559 = vpop.permute.xlu0 %558
    %vm560 = vcmp.eq.s32.totalorder %v495, %v514
    %vm561 = vcmp.eq.s32.totalorder %v495, %v517
    %vm562 = vcmp.eq.s32.totalorder %v495, %v520
    %vm563 = vcmp.eq.s32.totalorder %v495, %v523
    %vm564 = vcmp.eq.s32.totalorder %v495, %v526
    %vm565 = vcmp.eq.s32.totalorder %v495, %v529
    %vm566 = vcmp.eq.s32.totalorder %v495, %v532
    %vm567 = vcmp.eq.s32.totalorder %v495, %v535
    %vm568 = vcmp.eq.s32.totalorder %v495, %v538
    %vm569 = vcmp.eq.s32.totalorder %v495, %v541
    %vm570 = vcmp.eq.s32.totalorder %v495, %v544
    %vm571 = vcmp.eq.s32.totalorder %v495, %v547
    %vm572 = vcmp.eq.s32.totalorder %v495, %v550
    %vm573 = vcmp.eq.s32.totalorder %v495, %v553
    %vm574 = vcmp.eq.s32.totalorder %v495, %v556
    %vm575 = vcmp.eq.s32.totalorder %v495, %v559
    %v576 = vsel %vm560, %v122, 0.0
    %v577 = vsel %vm561, %v123, 0.0
    %v578 = vsel %vm562, %v124, 0.0
    %v579 = vsel %vm563, %v125, 0.0
    %v580 = vsel %vm564, %v126, 0.0
    %v581 = vsel %vm565, %v127, 0.0
    %v582 = vsel %vm566, %v128, 0.0
    %v583 = vsel %vm567, %v129, 0.0
    %v584 = vsel %vm568, %v130, 0.0
    %v585 = vsel %vm569, %v131, 0.0
    %v586 = vsel %vm570, %v132, 0.0
    %v587 = vsel %vm571, %v133, 0.0
    %v588 = vsel %vm572, %v134, 0.0
    %v589 = vsel %vm573, %v135, 0.0
    %v590 = vsel %vm574, %v136, 0.0
    %v591 = vsel %vm575, %v137, 0.0
    %592 = vadd.xlane.f32.xlu0 %v576
    %v593 = vpop.xlane.xlu0 %592
    %594 = vadd.xlane.f32.xlu0 %v577
    %v595 = vpop.xlane.xlu0 %594
    %596 = vadd.xlane.f32.xlu0 %v578
    %v597 = vpop.xlane.xlu0 %596
    %598 = vadd.xlane.f32.xlu0 %v579
    %v599 = vpop.xlane.xlu0 %598
    %600 = vadd.xlane.f32.xlu0 %v580
    %v601 = vpop.xlane.xlu0 %600
    %602 = vadd.xlane.f32.xlu0 %v581
    %v603 = vpop.xlane.xlu0 %602
    %604 = vadd.xlane.f32.xlu0 %v582
    %v605 = vpop.xlane.xlu0 %604
    %606 = vadd.xlane.f32.xlu0 %v583
    %v607 = vpop.xlane.xlu0 %606
    %608 = vadd.xlane.f32.xlu0 %v584
    %v609 = vpop.xlane.xlu0 %608
    %610 = vadd.xlane.f32.xlu0 %v585
    %v611 = vpop.xlane.xlu0 %610
    %612 = vadd.xlane.f32.xlu0 %v586
    %v613 = vpop.xlane.xlu0 %612
    %614 = vadd.xlane.f32.xlu0 %v587
    %v615 = vpop.xlane.xlu0 %614
    %616 = vadd.xlane.f32.xlu0 %v588
    %v617 = vpop.xlane.xlu0 %616
    %618 = vadd.xlane.f32.xlu0 %v589
    %v619 = vpop.xlane.xlu0 %618
    %620 = vadd.xlane.f32.xlu0 %v590
    %v621 = vpop.xlane.xlu0 %620
    %622 = vadd.xlane.f32.xlu0 %v591
    %v623 = vpop.xlane.xlu0 %622
    %v624 = vadd.f32 %v496, %v593
    %v625 = vadd.f32 %v497, %v595
    %v626 = vadd.f32 %v498, %v597
    %v627 = vadd.f32 %v499, %v599
    %v628 = vadd.f32 %v500, %v601
    %v629 = vadd.f32 %v501, %v603
    %v630 = vadd.f32 %v502, %v605
    %v631 = vadd.f32 %v503, %v607
    %v632 = vadd.f32 %v504, %v609
    %v633 = vadd.f32 %v505, %v611
    %v634 = vadd.f32 %v506, %v613
    %v635 = vadd.f32 %v507, %v615
    %v636 = vadd.f32 %v508, %v617
    %v637 = vadd.f32 %v509, %v619
    %v638 = vadd.f32 %v510, %v621
    %v639 = vadd.f32 %v511, %v623
    %640 = vst.msk [vmem:[#allocation4] sm:$0xff] %vm458, %v624
    %641 = vst.msk [vmem:[#allocation4 + $0x8] sm:$0xff] %vm458, %v625
    %642 = vst.msk [vmem:[#allocation4 + $0x10] sm:$0xff] %vm458, %v626
    %643 = vst.msk [vmem:[#allocation4 + $0x18] sm:$0xff] %vm458, %v627
    %644 = vst.msk [vmem:[#allocation4 + $0x20] sm:$0xff] %vm458, %v628
    %645 = vst.msk [vmem:[#allocation4 + $0x28] sm:$0xff] %vm458, %v629
    %646 = vst.msk [vmem:[#allocation4 + $0x30] sm:$0xff] %vm458, %v630
    %647 = vst.msk [vmem:[#allocation4 + $0x38] sm:$0xff] %vm458, %v631
    %648 = vst.msk [vmem:[#allocation4 + $0x40] sm:$0xff] %vm458, %v632
    %649 = vst.msk [vmem:[#allocation4 + $0x48] sm:$0xff] %vm458, %v633
    %650 = vst.msk [vmem:[#allocation4 + $0x50] sm:$0xff] %vm458, %v634
    %651 = vst.msk [vmem:[#allocation4 + $0x58] sm:$0xff] %vm458, %v635
    %652 = vst.msk [vmem:[#allocation4 + $0x60] sm:$0xff] %vm458, %v636
    %653 = vst.msk [vmem:[#allocation4 + $0x68] sm:$0xff] %vm458, %v637
    %654 = vst.msk [vmem:[#allocation4 + $0x70] sm:$0xff] %vm458, %v638
    %655 = vst.msk [vmem:[#allocation4 + $0x78] sm:$0xff] %vm458, %v639
    // Predicated region
    $region30: #{tpu_custom_call.1} parent=1 // pred_check
      %p656 = pneg %p53
    $region31: #{tpu_custom_call.1} parent=1 // pred_check_branch
      %658 = sbr.rel (%p656) target = $region33
    $region32: #{tpu_custom_call.1} parent=1 // pred_region
      %s659 = smul.u32 0, 128
      %s660 = scalar_lea.vmem %s0, %s659
      %v661 = vld [vmem:[%s660] sm:$0xff]
      %v662 = vld [vmem:[%s660 + $0x8] sm:$0xff]
      %v663 = vld [vmem:[%s660 + $0x10] sm:$0xff]
      %v664 = vld [vmem:[%s660 + $0x18] sm:$0xff]
      %v665 = vld [vmem:[%s660 + $0x20] sm:$0xff]
      %v666 = vld [vmem:[%s660 + $0x28] sm:$0xff]
      %v667 = vld [vmem:[%s660 + $0x30] sm:$0xff]
      %v668 = vld [vmem:[%s660 + $0x38] sm:$0xff]
      %v669 = vld [vmem:[%s660 + $0x40] sm:$0xff]
      %v670 = vld [vmem:[%s660 + $0x48] sm:$0xff]
      %v671 = vld [vmem:[%s660 + $0x50] sm:$0xff]
      %v672 = vld [vmem:[%s660 + $0x58] sm:$0xff]
      %v673 = vld [vmem:[%s660 + $0x60] sm:$0xff]
      %v674 = vld [vmem:[%s660 + $0x68] sm:$0xff]
      %v675 = vld [vmem:[%s660 + $0x70] sm:$0xff]
      %v676 = vld [vmem:[%s660 + $0x78] sm:$0xff]
      %v677 = vld [vmem:[%s3] sm:$0x1]
      %v678 = vld [vmem:[%s4] sm:$0x1]
      %v679 = vld [vmem:[%s0] sm:$0xff]
      %v680 = vld [vmem:[%s0 + $0x8] sm:$0xff]
      %v681 = vld [vmem:[%s0 + $0x10] sm:$0xff]
      %v682 = vld [vmem:[%s0 + $0x18] sm:$0xff]
      %v683 = vld [vmem:[%s0 + $0x20] sm:$0xff]
      %v684 = vld [vmem:[%s0 + $0x28] sm:$0xff]
      %v685 = vld [vmem:[%s0 + $0x30] sm:$0xff]
      %v686 = vld [vmem:[%s0 + $0x38] sm:$0xff]
      %v687 = vld [vmem:[%s0 + $0x40] sm:$0xff]
      %v688 = vld [vmem:[%s0 + $0x48] sm:$0xff]
      %v689 = vld [vmem:[%s0 + $0x50] sm:$0xff]
      %v690 = vld [vmem:[%s0 + $0x58] sm:$0xff]
      %v691 = vld [vmem:[%s0 + $0x60] sm:$0xff]
      %v692 = vld [vmem:[%s0 + $0x68] sm:$0xff]
      %v693 = vld [vmem:[%s0 + $0x70] sm:$0xff]
      %v694 = vld [vmem:[%s0 + $0x78] sm:$0xff]
      %695 = vmatpush.xpose.msra.mxu0 %v694
      %696 = vmatpush.xpose.msra.mxu0 %v693
      %697 = vmatpush.xpose.msra.mxu0 %v692
      %698 = vmatpush.xpose.msra.mxu0 %v691
      %699 = vmatpush.xpose.msra.mxu0 %v690
      %700 = vmatpush.xpose.msra.mxu0 %v689
      %701 = vmatpush.xpose.msra.mxu0 %v688
      %702 = vmatpush.xpose.msra.mxu0 %v687
      %703 = vmatpush.xpose.msra.mxu0 %v686
      %704 = vmatpush.xpose.msra.mxu0 %v685
      %705 = vmatpush.xpose.msra.mxu0 %v684
      %706 = vmatpush.xpose.msra.mxu0 %v683
      %707 = vmatpush.xpose.msra.mxu0 %v682
      %708 = vmatpush.xpose.msra.mxu0 %v681
      %709 = vmatpush.xpose.msra.mxu0 %v680
      %710 = vmatpush.xpose.msra.mxu0 %v679
      %711 = vmatmul.f32.gmra.mxu0 %v661
      %v712 = vpop.f32.mrf.mxu0
      %v713 = vadd.f32 0.0, %v712
      %714 = vmatmul.f32.gmra.mxu0 %v662
      %v715 = vpop.f32.mrf.mxu0
      %v716 = vadd.f32 0.0, %v715
      %717 = vmatmul.f32.gmra.mxu0 %v663
      %v718 = vpop.f32.mrf.mxu0
      %v719 = vadd.f32 0.0, %v718
      %720 = vmatmul.f32.gmra.mxu0 %v664
      %v721 = vpop.f32.mrf.mxu0
      %v722 = vadd.f32 0.0, %v721
      %723 = vmatmul.f32.gmra.mxu0 %v665
      %v724 = vpop.f32.mrf.mxu0
      %v725 = vadd.f32 0.0, %v724
      %726 = vmatmul.f32.gmra.mxu0 %v666
      %v727 = vpop.f32.mrf.mxu0
      %v728 = vadd.f32 0.0, %v727
      %729 = vmatmul.f32.gmra.mxu0 %v667
      %v730 = vpop.f32.mrf.mxu0
      %v731 = vadd.f32 0.0, %v730
      %732 = vmatmul.f32.gmra.mxu0 %v668
      %v733 = vpop.f32.mrf.mxu0
      %v734 = vadd.f32 0.0, %v733
      %735 = vmatmul.f32.gmra.mxu0 %v669
      %v736 = vpop.f32.mrf.mxu0
      %v737 = vadd.f32 0.0, %v736
      %738 = vmatmul.f32.gmra.mxu0 %v670
      %v739 = vpop.f32.mrf.mxu0
      %v740 = vadd.f32 0.0, %v739
      %741 = vmatmul.f32.gmra.mxu0 %v671
      %v742 = vpop.f32.mrf.mxu0
      %v743 = vadd.f32 0.0, %v742
      %744 = vmatmul.f32.gmra.mxu0 %v672
      %v745 = vpop.f32.mrf.mxu0
      %v746 = vadd.f32 0.0, %v745
      %747 = vmatmul.f32.gmra.mxu0 %v673
      %v748 = vpop.f32.mrf.mxu0
      %v749 = vadd.f32 0.0, %v748
      %750 = vmatmul.f32.gmra.mxu0 %v674
      %v751 = vpop.f32.mrf.mxu0
      %v752 = vadd.f32 0.0, %v751
      %753 = vmatmul.f32.gmra.mxu0 %v675
      %v754 = vpop.f32.mrf.mxu0
      %v755 = vadd.f32 0.0, %v754
      %756 = vmatmul.f32.gmra.mxu0 %v676
      %v757 = vpop.f32.mrf.mxu0
      %v758 = vadd.f32 0.0, %v757
      %759 = vdwg.mxu0
      %v760 = vperm.slane %v677, 0
      %vm761 = vcmp.eq.s32.totalorder %v514, %v760
      %vm762 = vcmp.eq.s32.totalorder %v517, %v760
      %vm763 = vcmp.eq.s32.totalorder %v520, %v760
      %vm764 = vcmp.eq.s32.totalorder %v523, %v760
      %vm765 = vcmp.eq.s32.totalorder %v526, %v760
      %vm766 = vcmp.eq.s32.totalorder %v529, %v760
      %vm767 = vcmp.eq.s32.totalorder %v532, %v760
      %vm768 = vcmp.eq.s32.totalorder %v535, %v760
      %vm769 = vcmp.eq.s32.totalorder %v538, %v760
      %vm770 = vcmp.eq.s32.totalorder %v541, %v760
      %vm771 = vcmp.eq.s32.totalorder %v544, %v760
      %vm772 = vcmp.eq.s32.totalorder %v547, %v760
      %vm773 = vcmp.eq.s32.totalorder %v550, %v760
      %vm774 = vcmp.eq.s32.totalorder %v553, %v760
      %vm775 = vcmp.eq.s32.totalorder %v556, %v760
      %vm776 = vcmp.eq.s32.totalorder %v559, %v760
      %v777 = vsel %vm761, %v713, 1e+30
      %v778 = vsel %vm762, %v716, 1e+30
      %v779 = vsel %vm763, %v719, 1e+30
      %v780 = vsel %vm764, %v722, 1e+30
      %v781 = vsel %vm765, %v725, 1e+30
      %v782 = vsel %vm766, %v728, 1e+30
      %v783 = vsel %vm767, %v731, 1e+30
      %v784 = vsel %vm768, %v734, 1e+30
      %v785 = vsel %vm769, %v737, 1e+30
      %v786 = vsel %vm770, %v740, 1e+30
      %v787 = vsel %vm771, %v743, 1e+30
      %v788 = vsel %vm772, %v746, 1e+30
      %v789 = vsel %vm773, %v749, 1e+30
      %v790 = vsel %vm774, %v752, 1e+30
      %v791 = vsel %vm775, %v755, 1e+30
      %v792 = vsel %vm776, %v758, 1e+30
      %793 = vmin.xlane.f32.xlu0 %v777
      %v794 = vpop.xlane.xlu0 %793
      %795 = vmin.xlane.f32.xlu0 %v778
      %v796 = vpop.xlane.xlu0 %795
      %797 = vmin.xlane.f32.xlu0 %v779
      %v798 = vpop.xlane.xlu0 %797
      %799 = vmin.xlane.f32.xlu0 %v780
      %v800 = vpop.xlane.xlu0 %799
      %801 = vmin.xlane.f32.xlu0 %v781
      %v802 = vpop.xlane.xlu0 %801
      %803 = vmin.xlane.f32.xlu0 %v782
      %v804 = vpop.xlane.xlu0 %803
      %805 = vmin.xlane.f32.xlu0 %v783
      %v806 = vpop.xlane.xlu0 %805
      %807 = vmin.xlane.f32.xlu0 %v784
      %v808 = vpop.xlane.xlu0 %807
      %809 = vmin.xlane.f32.xlu0 %v785
      %v810 = vpop.xlane.xlu0 %809
      %811 = vmin.xlane.f32.xlu0 %v786
      %v812 = vpop.xlane.xlu0 %811
      %813 = vmin.xlane.f32.xlu0 %v787
      %v814 = vpop.xlane.xlu0 %813
      %815 = vmin.xlane.f32.xlu0 %v788
      %v816 = vpop.xlane.xlu0 %815
      %817 = vmin.xlane.f32.xlu0 %v789
      %v818 = vpop.xlane.xlu0 %817
      %819 = vmin.xlane.f32.xlu0 %v790
      %v820 = vpop.xlane.xlu0 %819
      %821 = vmin.xlane.f32.xlu0 %v791
      %v822 = vpop.xlane.xlu0 %821
      %823 = vmin.xlane.f32.xlu0 %v792
      %v824 = vpop.xlane.xlu0 %823
      %v826 = vperm.slane %v678, 0
      %v828 = vadd.f32 %v713, %v826
      %v829 = vadd.f32 %v716, %v826
      %v830 = vadd.f32 %v719, %v826
      %v831 = vadd.f32 %v722, %v826
      %v832 = vadd.f32 %v725, %v826
      %v833 = vadd.f32 %v728, %v826
      %v834 = vadd.f32 %v731, %v826
      %v835 = vadd.f32 %v734, %v826
      %v836 = vadd.f32 %v737, %v826
      %v837 = vadd.f32 %v740, %v826
      %v838 = vadd.f32 %v743, %v826
      %v839 = vadd.f32 %v746, %v826
      %v840 = vadd.f32 %v749, %v826
      %v841 = vadd.f32 %v752, %v826
      %v842 = vadd.f32 %v755, %v826
      %v843 = vadd.f32 %v758, %v826
      %v844 = vsel %vm761, -1e+30, %v828
      %v845 = vsel %vm762, -1e+30, %v829
      %v846 = vsel %vm763, -1e+30, %v830
      %v847 = vsel %vm764, -1e+30, %v831
      %v848 = vsel %vm765, -1e+30, %v832
      %v849 = vsel %vm766, -1e+30, %v833
      %v850 = vsel %vm767, -1e+30, %v834
      %v851 = vsel %vm768, -1e+30, %v835
      %v852 = vsel %vm769, -1e+30, %v836
      %v853 = vsel %vm770, -1e+30, %v837
      %v854 = vsel %vm771, -1e+30, %v838
      %v855 = vsel %vm772, -1e+30, %v839
      %v856 = vsel %vm773, -1e+30, %v840
      %v857 = vsel %vm774, -1e+30, %v841
      %v858 = vsel %vm775, -1e+30, %v842
      %v859 = vsel %vm776, -1e+30, %v843
      %860 = vmax.xlane.f32.xlu0 %v844
      %v861 = vpop.xlane.xlu0 %860
      %862 = vmax.xlane.f32.xlu0 %v845
      %v863 = vpop.xlane.xlu0 %862
      %864 = vmax.xlane.f32.xlu0 %v846
      %v865 = vpop.xlane.xlu0 %864
      %866 = vmax.xlane.f32.xlu0 %v847
      %v867 = vpop.xlane.xlu0 %866
      %868 = vmax.xlane.f32.xlu0 %v848
      %v869 = vpop.xlane.xlu0 %868
      %870 = vmax.xlane.f32.xlu0 %v849
      %v871 = vpop.xlane.xlu0 %870
      %872 = vmax.xlane.f32.xlu0 %v850
      %v873 = vpop.xlane.xlu0 %872
      %874 = vmax.xlane.f32.xlu0 %v851
      %v875 = vpop.xlane.xlu0 %874
      %876 = vmax.xlane.f32.xlu0 %v852
      %v877 = vpop.xlane.xlu0 %876
      %878 = vmax.xlane.f32.xlu0 %v853
      %v879 = vpop.xlane.xlu0 %878
      %880 = vmax.xlane.f32.xlu0 %v854
      %v881 = vpop.xlane.xlu0 %880
      %882 = vmax.xlane.f32.xlu0 %v855
      %v883 = vpop.xlane.xlu0 %882
      %884 = vmax.xlane.f32.xlu0 %v856
      %v885 = vpop.xlane.xlu0 %884
      %886 = vmax.xlane.f32.xlu0 %v857
      %v887 = vpop.xlane.xlu0 %886
      %888 = vmax.xlane.f32.xlu0 %v858
      %v889 = vpop.xlane.xlu0 %888
      %890 = vmax.xlane.f32.xlu0 %v859
      %v891 = vpop.xlane.xlu0 %890
      %v892 = vsub.f32 %v861, %v794
      %v893 = vsub.f32 %v863, %v796
      %v894 = vsub.f32 %v865, %v798
      %v895 = vsub.f32 %v867, %v800
      %v896 = vsub.f32 %v869, %v802
      %v897 = vsub.f32 %v871, %v804
      %v898 = vsub.f32 %v873, %v806
      %v899 = vsub.f32 %v875, %v808
      %v900 = vsub.f32 %v877, %v810
      %v901 = vsub.f32 %v879, %v812
      %v902 = vsub.f32 %v881, %v814
      %v903 = vsub.f32 %v883, %v816
      %v904 = vsub.f32 %v885, %v818
      %v905 = vsub.f32 %v887, %v820
      %v906 = vsub.f32 %v889, %v822
      %v907 = vsub.f32 %v891, %v824
      %v908 = vadd.f32 %v892, 0.5
      %v909 = vadd.f32 %v893, 0.5
      %v910 = vadd.f32 %v894, 0.5
      %v911 = vadd.f32 %v895, 0.5
      %v912 = vadd.f32 %v896, 0.5
      %v913 = vadd.f32 %v897, 0.5
      %v914 = vadd.f32 %v898, 0.5
      %v915 = vadd.f32 %v899, 0.5
      %v916 = vadd.f32 %v900, 0.5
      %v917 = vadd.f32 %v901, 0.5
      %v918 = vadd.f32 %v902, 0.5
      %v919 = vadd.f32 %v903, 0.5
      %v920 = vadd.f32 %v904, 0.5
      %v921 = vadd.f32 %v905, 0.5
      %v922 = vadd.f32 %v906, 0.5
      %v923 = vadd.f32 %v907, 0.5
      %v924 = vmax.f32 %v908, 0.0
      %v925 = vmax.f32 %v909, 0.0
      %v926 = vmax.f32 %v910, 0.0
      %v927 = vmax.f32 %v911, 0.0
      %v928 = vmax.f32 %v912, 0.0
      %v929 = vmax.f32 %v913, 0.0
      %v930 = vmax.f32 %v914, 0.0
      %v931 = vmax.f32 %v915, 0.0
      %v932 = vmax.f32 %v916, 0.0
      %v933 = vmax.f32 %v917, 0.0
      %v934 = vmax.f32 %v918, 0.0
      %v935 = vmax.f32 %v919, 0.0
      %v936 = vmax.f32 %v920, 0.0
      %v937 = vmax.f32 %v921, 0.0
      %v938 = vmax.f32 %v922, 0.0
      %v939 = vmax.f32 %v923, 0.0
      %v940 = vsub.f32 0.8, %v794
      %v941 = vsub.f32 0.8, %v796
      %v942 = vsub.f32 0.8, %v798
      %v943 = vsub.f32 0.8, %v800
      %v944 = vsub.f32 0.8, %v802
      %v945 = vsub.f32 0.8, %v804
      %v946 = vsub.f32 0.8, %v806
      %v947 = vsub.f32 0.8, %v808
      %v948 = vsub.f32 0.8, %v810
      %v949 = vsub.f32 0.8, %v812
      %v950 = vsub.f32 0.8, %v814
      %v951 = vsub.f32 0.8, %v816
      %v952 = vsub.f32 0.8, %v818
      %v953 = vsub.f32 0.8, %v820
      %v954 = vsub.f32 0.8, %v822
      %v955 = vsub.f32 0.8, %v824
      %v956 = vmax.f32 %v940, 0.0
      %v957 = vmax.f32 %v941, 0.0
      %v958 = vmax.f32 %v942, 0.0
      %v959 = vmax.f32 %v943, 0.0
      %v960 = vmax.f32 %v944, 0.0
      %v961 = vmax.f32 %v945, 0.0
      %v962 = vmax.f32 %v946, 0.0
      %v963 = vmax.f32 %v947, 0.0
      %v964 = vmax.f32 %v948, 0.0
      %v965 = vmax.f32 %v949, 0.0
      %v966 = vmax.f32 %v950, 0.0
      %v967 = vmax.f32 %v951, 0.0
      %v968 = vmax.f32 %v952, 0.0
      %v969 = vmax.f32 %v953, 0.0
      %v970 = vmax.f32 %v954, 0.0
      %v971 = vmax.f32 %v955, 0.0
      %v972 = vsub.f32 %v861, 0.4
      %v973 = vsub.f32 %v863, 0.4
      %v974 = vsub.f32 %v865, 0.4
      %v975 = vsub.f32 %v867, 0.4
      %v976 = vsub.f32 %v869, 0.4
      %v977 = vsub.f32 %v871, 0.4
      %v978 = vsub.f32 %v873, 0.4
      %v979 = vsub.f32 %v875, 0.4
      %v980 = vsub.f32 %v877, 0.4
      %v981 = vsub.f32 %v879, 0.4
      %v982 = vsub.f32 %v881, 0.4
      %v983 = vsub.f32 %v883, 0.4
      %v984 = vsub.f32 %v885, 0.4
      %v985 = vsub.f32 %v887, 0.4
      %v986 = vsub.f32 %v889, 0.4
      %v987 = vsub.f32 %v891, 0.4
      %vm988 = vcmp.gt.f32.partialorder %v972, 0.0
      %vm989 = vcmp.gt.f32.partialorder %v973, 0.0
      %vm990 = vcmp.gt.f32.partialorder %v974, 0.0
      %vm991 = vcmp.gt.f32.partialorder %v975, 0.0
      %vm992 = vcmp.gt.f32.partialorder %v976, 0.0
      %vm993 = vcmp.gt.f32.partialorder %v977, 0.0
      %vm994 = vcmp.gt.f32.partialorder %v978, 0.0
      %vm995 = vcmp.gt.f32.partialorder %v979, 0.0
      %vm996 = vcmp.gt.f32.partialorder %v980, 0.0
      %vm997 = vcmp.gt.f32.partialorder %v981, 0.0
      %vm998 = vcmp.gt.f32.partialorder %v982, 0.0
      %vm999 = vcmp.gt.f32.partialorder %v983, 0.0
      %vm1000 = vcmp.gt.f32.partialorder %v984, 0.0
      %vm1001 = vcmp.gt.f32.partialorder %v985, 0.0
      %vm1002 = vcmp.gt.f32.partialorder %v986, 0.0
      %vm1003 = vcmp.gt.f32.partialorder %v987, 0.0
      %v1004 = vsel %vm988, %v972, 1.0
      %v1005 = vsel %vm989, %v973, 1.0
      %v1006 = vsel %vm990, %v974, 1.0
      %v1007 = vsel %vm991, %v975, 1.0
      %v1008 = vsel %vm992, %v976, 1.0
      %v1009 = vsel %vm993, %v977, 1.0
      %v1010 = vsel %vm994, %v978, 1.0
      %v1011 = vsel %vm995, %v979, 1.0
      %v1012 = vsel %vm996, %v980, 1.0
      %v1013 = vsel %vm997, %v981, 1.0
      %v1014 = vsel %vm998, %v982, 1.0
      %v1015 = vsel %vm999, %v983, 1.0
      %v1016 = vsel %vm1000, %v984, 1.0
      %v1017 = vsel %vm1001, %v985, 1.0
      %v1018 = vsel %vm1002, %v986, 1.0
      %v1019 = vsel %vm1003, %v987, 1.0
      %v1020 = vadd.f32 %v956, %v1004
      %v1021 = vadd.f32 %v957, %v1005
      %v1022 = vadd.f32 %v958, %v1006
      %v1023 = vadd.f32 %v959, %v1007
      %v1024 = vadd.f32 %v960, %v1008
      %v1025 = vadd.f32 %v961, %v1009
      %v1026 = vadd.f32 %v962, %v1010
      %v1027 = vadd.f32 %v963, %v1011
      %v1028 = vadd.f32 %v964, %v1012
      %v1029 = vadd.f32 %v965, %v1013
      %v1030 = vadd.f32 %v966, %v1014
      %v1031 = vadd.f32 %v967, %v1015
      %v1032 = vadd.f32 %v968, %v1016
      %v1033 = vadd.f32 %v969, %v1017
      %v1034 = vadd.f32 %v970, %v1018
      %v1035 = vadd.f32 %v971, %v1019
      %v1036 = vadd.f32 %v924, %v1020
      %v1037 = vadd.f32 %v925, %v1021
      %v1038 = vadd.f32 %v926, %v1022
      %v1039 = vadd.f32 %v927, %v1023
      %v1040 = vadd.f32 %v928, %v1024
      %v1041 = vadd.f32 %v929, %v1025
      %v1042 = vadd.f32 %v930, %v1026
      %v1043 = vadd.f32 %v931, %v1027
      %v1044 = vadd.f32 %v932, %v1028
      %v1045 = vadd.f32 %v933, %v1029
      %v1046 = vadd.f32 %v934, %v1030
      %v1047 = vadd.f32 %v935, %v1031
      %v1048 = vadd.f32 %v936, %v1032
      %v1049 = vadd.f32 %v937, %v1033
      %v1050 = vadd.f32 %v938, %v1034
      %v1051 = vadd.f32 %v939, %v1035
      %v1052 = vld [vmem:[#allocation4] sm:$0xff]
      %v1053 = vld [vmem:[#allocation4 + $0x8] sm:$0xff]
      %v1054 = vld [vmem:[#allocation4 + $0x10] sm:$0xff]
      %v1055 = vld [vmem:[#allocation4 + $0x18] sm:$0xff]
      %v1056 = vld [vmem:[#allocation4 + $0x20] sm:$0xff]
      %v1057 = vld [vmem:[#allocation4 + $0x28] sm:$0xff]
      %v1058 = vld [vmem:[#allocation4 + $0x30] sm:$0xff]
      %v1059 = vld [vmem:[#allocation4 + $0x38] sm:$0xff]
      %v1060 = vld [vmem:[#allocation4 + $0x40] sm:$0xff]
      %v1061 = vld [vmem:[#allocation4 + $0x48] sm:$0xff]
      %v1062 = vld [vmem:[#allocation4 + $0x50] sm:$0xff]
      %v1063 = vld [vmem:[#allocation4 + $0x58] sm:$0xff]
      %v1064 = vld [vmem:[#allocation4 + $0x60] sm:$0xff]
      %v1065 = vld [vmem:[#allocation4 + $0x68] sm:$0xff]
      %v1066 = vld [vmem:[#allocation4 + $0x70] sm:$0xff]
      %v1067 = vld [vmem:[#allocation4 + $0x78] sm:$0xff]
      %v1068 = vld [vmem:[#allocation2] sm:$0xff]
      %v1069 = vld [vmem:[#allocation2 + $0x8] sm:$0xff]
      %v1070 = vld [vmem:[#allocation2 + $0x10] sm:$0xff]
      %v1071 = vld [vmem:[#allocation2 + $0x18] sm:$0xff]
      %v1072 = vld [vmem:[#allocation2 + $0x20] sm:$0xff]
      %v1073 = vld [vmem:[#allocation2 + $0x28] sm:$0xff]
      %v1074 = vld [vmem:[#allocation2 + $0x30] sm:$0xff]
      %v1075 = vld [vmem:[#allocation2 + $0x38] sm:$0xff]
      %v1076 = vld [vmem:[#allocation2 + $0x40] sm:$0xff]
      %v1077 = vld [vmem:[#allocation2 + $0x48] sm:$0xff]
      %v1078 = vld [vmem:[#allocation2 + $0x50] sm:$0xff]
      %v1079 = vld [vmem:[#allocation2 + $0x58] sm:$0xff]
      %v1080 = vld [vmem:[#allocation2 + $0x60] sm:$0xff]
      %v1081 = vld [vmem:[#allocation2 + $0x68] sm:$0xff]
      %v1082 = vld [vmem:[#allocation2 + $0x70] sm:$0xff]
      %v1083 = vld [vmem:[#allocation2 + $0x78] sm:$0xff]
      %v1084 = vld [vmem:[#allocation3] sm:$0xff]
      %v1085 = vld [vmem:[#allocation3 + $0x8] sm:$0xff]
      %v1086 = vld [vmem:[#allocation3 + $0x10] sm:$0xff]
      %v1087 = vld [vmem:[#allocation3 + $0x18] sm:$0xff]
      %v1088 = vld [vmem:[#allocation3 + $0x20] sm:$0xff]
      %v1089 = vld [vmem:[#allocation3 + $0x28] sm:$0xff]
      %v1090 = vld [vmem:[#allocation3 + $0x30] sm:$0xff]
      %v1091 = vld [vmem:[#allocation3 + $0x38] sm:$0xff]
      %v1092 = vld [vmem:[#allocation3 + $0x40] sm:$0xff]
      %v1093 = vld [vmem:[#allocation3 + $0x48] sm:$0xff]
      %v1094 = vld [vmem:[#allocation3 + $0x50] sm:$0xff]
      %v1095 = vld [vmem:[#allocation3 + $0x58] sm:$0xff]
      %v1096 = vld [vmem:[#allocation3 + $0x60] sm:$0xff]
      %v1097 = vld [vmem:[#allocation3 + $0x68] sm:$0xff]
      %v1098 = vld [vmem:[#allocation3 + $0x70] sm:$0xff]
      %v1099 = vld [vmem:[#allocation3 + $0x78] sm:$0xff]
      %v1100 = vlog2.pop %v1084
      %v1101 = vmul.f32 %v1100, 0.6931472
      %v1102 = vlog2.pop %v1085
      %v1103 = vmul.f32 %v1102, 0.6931472
      %v1104 = vlog2.pop %v1086
      %v1105 = vmul.f32 %v1104, 0.6931472
      %v1106 = vlog2.pop %v1087
      %v1107 = vmul.f32 %v1106, 0.6931472
      %v1108 = vlog2.pop %v1088
      %v1109 = vmul.f32 %v1108, 0.6931472
      %v1110 = vlog2.pop %v1089
      %v1111 = vmul.f32 %v1110, 0.6931472
      %v1112 = vlog2.pop %v1090
      %v1113 = vmul.f32 %v1112, 0.6931472
      %v1114 = vlog2.pop %v1091
      %v1115 = vmul.f32 %v1114, 0.6931472
      %v1116 = vlog2.pop %v1092
      %v1117 = vmul.f32 %v1116, 0.6931472
      %v1118 = vlog2.pop %v1093
      %v1119 = vmul.f32 %v1118, 0.6931472
      %v1120 = vlog2.pop %v1094
      %v1121 = vmul.f32 %v1120, 0.6931472
      %v1122 = vlog2.pop %v1095
      %v1123 = vmul.f32 %v1122, 0.6931472
      %v1124 = vlog2.pop %v1096
      %v1125 = vmul.f32 %v1124, 0.6931472
      %v1126 = vlog2.pop %v1097
      %v1127 = vmul.f32 %v1126, 0.6931472
      %v1128 = vlog2.pop %v1098
      %v1129 = vmul.f32 %v1128, 0.6931472
      %v1130 = vlog2.pop %v1099
      %v1131 = vmul.f32 %v1130, 0.6931472
      %v1132 = vadd.f32 %v1068, %v1101
      %v1133 = vadd.f32 %v1069, %v1103
      %v1134 = vadd.f32 %v1070, %v1105
      %v1135 = vadd.f32 %v1071, %v1107
      %v1136 = vadd.f32 %v1072, %v1109
      %v1137 = vadd.f32 %v1073, %v1111
      %v1138 = vadd.f32 %v1074, %v1113
      %v1139 = vadd.f32 %v1075, %v1115
      %v1140 = vadd.f32 %v1076, %v1117
      %v1141 = vadd.f32 %v1077, %v1119
      %v1142 = vadd.f32 %v1078, %v1121
      %v1143 = vadd.f32 %v1079, %v1123
      %v1144 = vadd.f32 %v1080, %v1125
      %v1145 = vadd.f32 %v1081, %v1127
      %v1146 = vadd.f32 %v1082, %v1129
      %v1147 = vadd.f32 %v1083, %v1131
      %v1148 = vsub.f32 %v1132, %v1052
      %v1149 = vsub.f32 %v1133, %v1053
      %v1150 = vsub.f32 %v1134, %v1054
      %v1151 = vsub.f32 %v1135, %v1055
      %v1152 = vsub.f32 %v1136, %v1056
      %v1153 = vsub.f32 %v1137, %v1057
      %v1154 = vsub.f32 %v1138, %v1058
      %v1155 = vsub.f32 %v1139, %v1059
      %v1156 = vsub.f32 %v1140, %v1060
      %v1157 = vsub.f32 %v1141, %v1061
      %v1158 = vsub.f32 %v1142, %v1062
      %v1159 = vsub.f32 %v1143, %v1063
      %v1160 = vsub.f32 %v1144, %v1064
      %v1161 = vsub.f32 %v1145, %v1065
      %v1162 = vsub.f32 %v1146, %v1066
      %v1163 = vsub.f32 %v1147, %v1067
      %v1164 = vadd.f32 %v1036, %v1148
      %v1165 = vadd.f32 %v1037, %v1149
      %v1166 = vadd.f32 %v1038, %v1150
      %v1167 = vadd.f32 %v1039, %v1151
      %v1168 = vadd.f32 %v1040, %v1152
      %v1169 = vadd.f32 %v1041, %v1153
      %v1170 = vadd.f32 %v1042, %v1154
      %v1171 = vadd.f32 %v1043, %v1155
      %v1172 = vadd.f32 %v1044, %v1156
      %v1173 = vadd.f32 %v1045, %v1157
      %v1174 = vadd.f32 %v1046, %v1158
      %v1175 = vadd.f32 %v1047, %v1159
      %v1176 = vadd.f32 %v1048, %v1160
      %v1177 = vadd.f32 %v1049, %v1161
      %v1178 = vadd.f32 %v1050, %v1162
      %v1179 = vadd.f32 %v1051, %v1163
      %vm1180 = vcmp.ge.s32.totalorder %v37, 0
      %vm1181 = vcmp.ge.s32.totalorder %v38, 0
      %vm1182 = vcmp.ge.s32.totalorder %v39, 0
      %vm1183 = vcmp.ge.s32.totalorder %v40, 0
      %vm1184 = vcmp.ge.s32.totalorder %v41, 0
      %vm1185 = vcmp.ge.s32.totalorder %v42, 0
      %vm1186 = vcmp.ge.s32.totalorder %v43, 0
      %vm1187 = vcmp.ge.s32.totalorder %v44, 0
      %vm1188 = vcmp.ge.s32.totalorder %v45, 0
      %vm1189 = vcmp.ge.s32.totalorder %v46, 0
      %vm1190 = vcmp.ge.s32.totalorder %v47, 0
      %vm1191 = vcmp.ge.s32.totalorder %v48, 0
      %vm1192 = vcmp.ge.s32.totalorder %v49, 0
      %vm1193 = vcmp.ge.s32.totalorder %v50, 0
      %vm1194 = vcmp.ge.s32.totalorder %v51, 0
      %vm1195 = vcmp.ge.s32.totalorder %v52, 0
      %v1196 = vsel %vm1180, %v1164, 0.0
      %v1197 = vsel %vm1181, %v1165, 0.0
      %v1198 = vsel %vm1182, %v1166, 0.0
      %v1199 = vsel %vm1183, %v1167, 0.0
      %v1200 = vsel %vm1184, %v1168, 0.0
      %v1201 = vsel %vm1185, %v1169, 0.0
      %v1202 = vsel %vm1186, %v1170, 0.0
      %v1203 = vsel %vm1187, %v1171, 0.0
      %v1204 = vsel %vm1188, %v1172, 0.0
      %v1205 = vsel %vm1189, %v1173, 0.0
      %v1206 = vsel %vm1190, %v1174, 0.0
      %v1207 = vsel %vm1191, %v1175, 0.0
      %v1208 = vsel %vm1192, %v1176, 0.0
      %v1209 = vsel %vm1193, %v1177, 0.0
      %v1210 = vsel %vm1194, %v1178, 0.0
      %v1211 = vsel %vm1195, %v1179, 0.0
      %v1212 = vsel %vm458, %v1196, 0.0
      %v1213 = vsel %vm458, %v1197, 0.0
      %v1214 = vadd.f32 %v1212, %v1213
      %v1215 = vsel %vm458, %v1198, 0.0
      %v1216 = vadd.f32 %v1214, %v1215
      %v1217 = vsel %vm458, %v1199, 0.0
      %v1218 = vadd.f32 %v1216, %v1217
      %v1219 = vsel %vm458, %v1200, 0.0
      %v1220 = vadd.f32 %v1218, %v1219
      %v1221 = vsel %vm458, %v1201, 0.0
      %v1222 = vadd.f32 %v1220, %v1221
      %v1223 = vsel %vm458, %v1202, 0.0
      %v1224 = vadd.f32 %v1222, %v1223
      %v1225 = vsel %vm458, %v1203, 0.0
      %v1226 = vadd.f32 %v1224, %v1225
      %v1227 = vsel %vm458, %v1204, 0.0
      %v1228 = vadd.f32 %v1226, %v1227
      %v1229 = vsel %vm458, %v1205, 0.0
      %v1230 = vadd.f32 %v1228, %v1229
      %v1231 = vsel %vm458, %v1206, 0.0
      %v1232 = vadd.f32 %v1230, %v1231
      %v1233 = vsel %vm458, %v1207, 0.0
      %v1234 = vadd.f32 %v1232, %v1233
      %v1235 = vsel %vm458, %v1208, 0.0
      %v1236 = vadd.f32 %v1234, %v1235
      %v1237 = vsel %vm458, %v1209, 0.0
      %v1238 = vadd.f32 %v1236, %v1237
      %v1239 = vsel %vm458, %v1210, 0.0
      %v1240 = vadd.f32 %v1238, %v1239
      %v1241 = vsel %vm458, %v1211, 0.0
      %v1242 = vadd.f32 %v1240, %v1241
      %1243 = vadd.xlane.f32.xlu0 %v1242
      %v1244 = vpop.xlane.xlu0 %1243
      %v1245 = vrot.slane %v1244, 4
      %v1246 = vadd.f32 %v1244, %v1245
      %v1247 = vrot.slane %v1246, 2
      %v1248 = vadd.f32 %v1246, %v1247
      %v1249 = vrot.slane %v1248, 1
      %v1250 = vadd.f32 %v1248, %v1249
      %s1251 = vtos %v1250
      %s1252 = scalar_lea.smem [#allocation9], 0
      %1253 = sst [smem:[%s1252]] %s1251
    $region33: #{tpu_custom_call.1} parent=1 // pred_fallthru
      _
    // Predicated region
    $region34: #{tpu_custom_call.1} parent=1 // pred_check
      _
    $region35: #{tpu_custom_call.1} parent=1 // pred_check_branch
      %1255 = sbr.rel (0) target = $region37
    $region36: #{tpu_custom_call.1} parent=1 // pred_region
      %1257 = vsyncadd [#allocation8], 0
      %s1259 = sshll.u32 %s5, 4
      %s1260 = int_to_ptr.hbm [resolvable:$true] %s1259
      %1262 = dma.smem_to_hbm [#allocation9], 16, %s1260, [#allocation8]
    $region37: #{tpu_custom_call.1} parent=1 // pred_fallthru
      _
    // Predicated region
    $region38: #{tpu_custom_call.1} parent=1 // pred_check
      _
    $region39: #{tpu_custom_call.1} parent=1 // pred_check_branch
      %1264 = sbr.rel (0) target = $region41
    $region40: #{tpu_custom_call.1} parent=1 // pred_region
      %1266 = dma.done [#allocation8], 16
    $region41: #{tpu_custom_call.1} parent=1 // pred_fallthru
      _
    %1267 = sfence
    %1268 = vsyncpa [#allocation7], 1
    %1269 = vsyncpa [#allocation8], 1

</llo_original>
